<compile_context>
chip_gen: v7x
topology: tpu7x:2x2x1
jax: 0.10.0
libtpu: 0.0.40
codegen_flags: <defaults>
</compile_context>

<pallas_src>
import math
import jax
import jax.numpy as jnp
from jax.experimental import pallas as pl
from jax.experimental.pallas import tpu as pltpu  # noqa: F401 (TPU backend)

NUM_LAYERS = 8
ALPHA = 0.85
THETA = 1.5


def _net_kernel(xin_ref, a_ref, w_in_ref, b_in_ref,
                w1_ref, w2_ref, w_out_ref, b_out_ref, z_ref):
    """Fused forward in transposed layout.

    xin_ref : (2F, N) bf16  -- [data.x^T ; data_str^T]
    a_ref   : (N, N)  bf16  -- A_norm^T (GCN-normalized adjacency, transposed)
    w_in_ref: (2H, 2F) bf16 -- blockdiag(lins[0].W^T, lin11.W^T)
    b_in_ref: (2H, 1) f32
    w1_ref  : (L, 2H, 2H) bf16 -- per-layer blockdiag(W1a_eff^T, W1b_eff^T)
    w2_ref  : (L, 2H, 2H) bf16 -- per-layer blockdiag(W2a_eff^T, W2b_eff^T)
    w_out_ref: (2, 2H) bf16  -- fused output heads
    b_out_ref: (2, 1) f32
    z_ref   : (2, N) f32 output (row 0 = z^T, row 1 = z1^T)
    """
    f32 = jnp.float32
    bf16 = jnp.bfloat16

    # Fused entry linears for both branches: (2H,2F)@(2F,N) -> (2H,N), + relu.
    x0 = jnp.maximum(
        jnp.dot(w_in_ref[...], xin_ref[...], preferred_element_type=f32)
        + b_in_ref[...], 0.0)
    x0_bf = x0.astype(bf16)

    # Layer-constant residual terms c[l] = W2_eff[l]^T @ x0  (independent of
    # the serial A-chain, so they schedule around it).
    c = [jnp.dot(w2_ref[l], x0_bf, preferred_element_type=f32)
         for l in range(NUM_LAYERS)]

    # Serial GCN2 chain, both branches fused, scalars pre-folded into W1_eff.
    # (A @ x)^T == x^T @ A^T ; a_ref holds A^T. a_ref is re-read from VMEM at
    # the dot site each layer (no long-lived vreg pinning of the 128x128 tile).
    x = x0
    for l in range(NUM_LAYERS):
        h = jnp.dot(x.astype(bf16), a_ref[...], preferred_element_type=f32)
        x = jnp.maximum(
            jnp.dot(w1_ref[l], h.astype(bf16), preferred_element_type=f32)
            + c[l], 0.0)

    # Fused output heads -> one lane-dense (2, N) store.
    z_ref[...] = (jnp.dot(w_out_ref[...], x.astype(bf16),
                          preferred_element_type=f32) + b_out_ref[...])


def _fold_params(params):
    """Fold alpha/beta into the weights and fuse the two branches (host side)."""
    (w_lin0, b_lin0, w_lin11, b_lin11,
     w1a, w2a, w1b, w2b,
     w_za, b_za, w_zb, b_zb) = params
    f_in, h = w_lin0.shape
    bf16 = jnp.bfloat16
    eye = jnp.eye(h, dtype=jnp.float32)

    # Block-diagonal entry weight applied on the left in the transposed layout.
    w_in = jnp.zeros((2 * h, 2 * f_in), jnp.float32)
    w_in = w_in.at[:h, :f_in].set(w_lin0.T)
    w_in = w_in.at[h:, f_in:].set(w_lin11.T)
    b_in = jnp.concatenate([b_lin0.reshape(h, 1), b_lin11.reshape(h, 1)], axis=0)

    layers = jnp.arange(1, NUM_LAYERS + 1, dtype=jnp.float32)
    betas = jnp.log(THETA / layers + 1.0)[:, None, None]          # (L,1,1)

    def eff_t(w_stack, scale):
        # scale*((1-beta) I + beta W), then transpose for left-multiplication.
        w_eff = scale * ((1.0 - betas) * eye[None] + betas * w_stack)
        return jnp.transpose(w_eff, (0, 2, 1))

    def blockdiag(wa, wb):
        out = jnp.zeros((NUM_LAYERS, 2 * h, 2 * h), jnp.float32)
        out = out.at[:, :h, :h].set(wa)
        out = out.at[:, h:, h:].set(wb)
        return out

    w1 = blockdiag(eff_t(w1a, 1.0 - ALPHA), eff_t(w1b, 1.0 - ALPHA)).astype(bf16)
    w2 = blockdiag(eff_t(w2a, ALPHA), eff_t(w2b, ALPHA)).astype(bf16)

    w_out = jnp.zeros((2, 2 * h), jnp.float32)
    w_out = w_out.at[0, :h].set(w_za[:, 0])
    w_out = w_out.at[1, h:].set(w_zb[:, 0])
    b_out = jnp.concatenate([b_za.reshape(1, 1), b_zb.reshape(1, 1)], axis=0)

    return w_in.astype(bf16), b_in, w1, w2, w_out.astype(bf16), b_out


@jax.jit
def net_forward(x, x_str, a_norm, params):
    n = x.shape[0]
    w_in, b_in, w1, w2, w_out, b_out = _fold_params(params)

    # Transposed layout: features on sublanes, nodes on lanes.
    xin = jnp.concatenate([x.T, x_str.T], axis=0).astype(jnp.bfloat16)  # (2F, N)
    a_t = a_norm.T.astype(jnp.bfloat16)   # pass A^T; no symmetry assumption

    # Whole problem (~100 KB) fits in VMEM: no grid, whole-array refs.
    zcat = pl.pallas_call(
        _net_kernel,
        out_shape=jax.ShapeDtypeStruct((2, n), jnp.float32),
    )(xin, a_t, w_in, b_in, w1, w2, w_out, b_out)
    return zcat[0].reshape(n, 1), zcat[1].reshape(n, 1)


def net_forward_ref(x, x_str, a_norm, params):
    """Pure-JAX f32 reference of the original module semantics (eval mode)."""
    (w_lin0, b_lin0, w_lin11, b_lin11,
     w1a, w2a, w1b, w2b,
     w_za, b_za, w_zb, b_zb) = params

    def gcn2_stack(x_init, w1, w2):
        xc = x_init
        x0s = ALPHA * x_init
        for layer in range(NUM_LAYERS):
            beta = math.log(THETA / (layer + 1) + 1.0)
            hh = (1.0 - ALPHA) * (a_norm @ xc)
            out = ((1.0 - beta) * hh + beta * (hh @ w1[layer])
                   + (1.0 - beta) * x0s + beta * (x0s @ w2[layer]))
            xc = jnp.maximum(out, 0.0)
        return xc

    x0 = jnp.maximum(x @ w_lin0 + b_lin0, 0.0)
    x1_0 = jnp.maximum(x_str @ w_lin11 + b_lin11, 0.0)
    xa = gcn2_stack(x0, w1a, w2a)
    xb = gcn2_stack(x1_0, w1b, w2b)
    return xa @ w_za + b_za, xb @ w_zb + b_zb


def _linear_params(key, fan_in, fan_out):
    # PyTorch nn.Linear default init: U(-1/sqrt(fan_in), 1/sqrt(fan_in))
    bound = 1.0 / math.sqrt(fan_in)
    kw, kb = jax.random.split(key)
    w = jax.random.uniform(kw, (fan_in, fan_out), jnp.float32, -bound, bound)
    b = jax.random.uniform(kb, (1, fan_out), jnp.float32, -bound, bound)
    return w, b


if __name__ == "__main__":
    key = jax.random.PRNGKey(0)
    N, F, H = 128, 32, 8        # num_nodes, num_feature, hidden_channels_2
    keys = jax.random.split(key, 12)

    x = jax.random.normal(keys[0], (N, F), jnp.float32)        # data.x
    x_str = jax.random.normal(keys[1], (N, F), jnp.float32)    # data_str

    # Synthetic symmetric graph -> dense GCN normalization D^-1/2 A D^-1/2,
    # no self loops (add_self_loops=False).
    logits = jax.random.uniform(keys[2], (N, N))
    adj = ((logits + logits.T) > 1.6).astype(jnp.float32)
    adj = adj * (1.0 - jnp.eye(N, dtype=jnp.float32))
    deg = adj.sum(axis=1)
    dinv = jnp.where(deg > 0, 1.0 / jnp.sqrt(jnp.maximum(deg, 1e-12)), 0.0)
    a_norm = dinv[:, None] * adj * dinv[None, :]

    w_lin0, b_lin0 = _linear_params(keys[3], F, H)    # lins[0]
    w_lin11, b_lin11 = _linear_params(keys[4], F, H)  # lin11
    w_za, b_za = _linear_params(keys[5], H, 1)        # lins[1]
    w_zb, b_zb = _linear_params(keys[6], H, 1)        # lin3

    glorot = math.sqrt(6.0 / (H + H))                 # GCN2Conv glorot init
    w1a = jax.random.uniform(keys[7], (NUM_LAYERS, H, H), jnp.float32, -glorot, glorot)
    w2a = jax.random.uniform(keys[8], (NUM_LAYERS, H, H), jnp.float32, -glorot, glorot)
    w1b = jax.random.uniform(keys[9], (NUM_LAYERS, H, H), jnp.float32, -glorot, glorot)
    w2b = jax.random.uniform(keys[10], (NUM_LAYERS, H, H), jnp.float32, -glorot, glorot)

    params = (w_lin0, b_lin0, w_lin11, b_lin11,
              w1a, w2a, w1b, w2b,
              w_za, b_za, w_zb, b_zb)

    z, z1 = net_forward(x, x_str, a_norm, params)
    jax.block_until_ready((z, z1))
    assert z.shape == (N, 1) and z1.shape == (N, 1)
    assert bool(jnp.all(jnp.isfinite(z))) and bool(jnp.all(jnp.isfinite(z1)))

    # Validate the fused bf16 kernel against the f32 reference (loose tol for
    # bf16 matmul inputs with f32 accumulation).
    z_ref, z1_ref = net_forward_ref(x, x_str, a_norm, params)
    assert bool(jnp.allclose(z, z_ref, atol=5e-2, rtol=5e-2))
    assert bool(jnp.allclose(z1, z1_ref, atol=5e-2, rtol=5e-2))

    print("KERNEL_OK")
</pallas_src>

<mosaic_0001>
module attributes {stable_mosaic.version = 11 : i64} {
  func.func @_net_kernel(%arg0: memref<64x128xbf16, #tpu.memory_space<vmem>>, %arg1: memref<128x128xbf16, #tpu.memory_space<vmem>>, %arg2: memref<16x64xbf16, #tpu.memory_space<vmem>>, %arg3: memref<16x1xf32, #tpu.memory_space<vmem>>, %arg4: memref<8x16x16xbf16, #tpu.memory_space<vmem>>, %arg5: memref<8x16x16xbf16, #tpu.memory_space<vmem>>, %arg6: memref<2x16xbf16, #tpu.memory_space<vmem>>, %arg7: memref<2x1xf32, #tpu.memory_space<vmem>>, %arg8: memref<2x128xf32, #tpu.memory_space<vmem>>) attributes {dimension_semantics = [], scalar_prefetch = 0 : i64, scratch_operands = 0 : i64, tpu.core_type = #tpu.core_type<tc>} {
    %c0 = arith.constant 0 : index
    %c0_0 = arith.constant 0 : index
    %0 = vector.load %arg2[%c0, %c0_0] : memref<16x64xbf16, #tpu.memory_space<vmem>>, vector<16x64xbf16>
    %c0_1 = arith.constant 0 : index
    %c0_2 = arith.constant 0 : index
    %1 = vector.load %arg0[%c0_1, %c0_2] : memref<64x128xbf16, #tpu.memory_space<vmem>>, vector<64x128xbf16>
    %cst = arith.constant dense<0.000000e+00> : vector<16x128xf32>
    %2 = tpu.matmul %0, %1, %cst {dimension_numbers = #tpu.dot_dimension_numbers<[1], [0], [0], [1], [0, 0, 1, 1], [], []>} : vector<16x64xbf16>, vector<64x128xbf16>, vector<16x128xf32> -> vector<16x128xf32>
    %c0_3 = arith.constant 0 : index
    %c0_4 = arith.constant 0 : index
    %3 = vector.load %arg3[%c0_3, %c0_4] : memref<16x1xf32, #tpu.memory_space<vmem>>, vector<16x1xf32>
    %4 = vector.broadcast %3 : vector<16x1xf32> to vector<16x128xf32>
    %5 = arith.addf %2, %4 : vector<16x128xf32>
    %cst_5 = arith.constant 0.000000e+00 : f32
    %6 = vector.broadcast %cst_5 : f32 to vector<16x128xf32>
    %7 = arith.maximumf %5, %6 : vector<16x128xf32>
    %8 = arith.truncf %7 : vector<16x128xf32> to vector<16x128xbf16>
    %c0_6 = arith.constant 0 : index
    %c0_7 = arith.constant 0 : index
    %c0_8 = arith.constant 0 : index
    %9 = vector.load %arg5[%c0_6, %c0_7, %c0_8] : memref<8x16x16xbf16, #tpu.memory_space<vmem>>, vector<1x16x16xbf16>
    %10 = vector.shape_cast %9 : vector<1x16x16xbf16> to vector<16x16xbf16>
    %cst_9 = arith.constant dense<0.000000e+00> : vector<16x128xf32>
    %11 = tpu.matmul %10, %8, %cst_9 {dimension_numbers = #tpu.dot_dimension_numbers<[1], [0], [0], [1], [0, 0, 1, 1], [], []>} : vector<16x16xbf16>, vector<16x128xbf16>, vector<16x128xf32> -> vector<16x128xf32>
    %c1 = arith.constant 1 : index
    %c0_10 = arith.constant 0 : index
    %c0_11 = arith.constant 0 : index
    %12 = vector.load %arg5[%c1, %c0_10, %c0_11] : memref<8x16x16xbf16, #tpu.memory_space<vmem>>, vector<1x16x16xbf16>
    %13 = vector.shape_cast %12 : vector<1x16x16xbf16> to vector<16x16xbf16>
    %cst_12 = arith.constant dense<0.000000e+00> : vector<16x128xf32>
    %14 = tpu.matmul %13, %8, %cst_12 {dimension_numbers = #tpu.dot_dimension_numbers<[1], [0], [0], [1], [0, 0, 1, 1], [], []>} : vector<16x16xbf16>, vector<16x128xbf16>, vector<16x128xf32> -> vector<16x128xf32>
    %c2 = arith.constant 2 : index
    %c0_13 = arith.constant 0 : index
    %c0_14 = arith.constant 0 : index
    %15 = vector.load %arg5[%c2, %c0_13, %c0_14] : memref<8x16x16xbf16, #tpu.memory_space<vmem>>, vector<1x16x16xbf16>
    %16 = vector.shape_cast %15 : vector<1x16x16xbf16> to vector<16x16xbf16>
    %cst_15 = arith.constant dense<0.000000e+00> : vector<16x128xf32>
    %17 = tpu.matmul %16, %8, %cst_15 {dimension_numbers = #tpu.dot_dimension_numbers<[1], [0], [0], [1], [0, 0, 1, 1], [], []>} : vector<16x16xbf16>, vector<16x128xbf16>, vector<16x128xf32> -> vector<16x128xf32>
    %c3 = arith.constant 3 : index
    %c0_16 = arith.constant 0 : index
    %c0_17 = arith.constant 0 : index
    %18 = vector.load %arg5[%c3, %c0_16, %c0_17] : memref<8x16x16xbf16, #tpu.memory_space<vmem>>, vector<1x16x16xbf16>
    %19 = vector.shape_cast %18 : vector<1x16x16xbf16> to vector<16x16xbf16>
    %cst_18 = arith.constant dense<0.000000e+00> : vector<16x128xf32>
    %20 = tpu.matmul %19, %8, %cst_18 {dimension_numbers = #tpu.dot_dimension_numbers<[1], [0], [0], [1], [0, 0, 1, 1], [], []>} : vector<16x16xbf16>, vector<16x128xbf16>, vector<16x128xf32> -> vector<16x128xf32>
    %c4 = arith.constant 4 : index
    %c0_19 = arith.constant 0 : index
    %c0_20 = arith.constant 0 : index
    %21 = vector.load %arg5[%c4, %c0_19, %c0_20] : memref<8x16x16xbf16, #tpu.memory_space<vmem>>, vector<1x16x16xbf16>
    %22 = vector.shape_cast %21 : vector<1x16x16xbf16> to vector<16x16xbf16>
    %cst_21 = arith.constant dense<0.000000e+00> : vector<16x128xf32>
    %23 = tpu.matmul %22, %8, %cst_21 {dimension_numbers = #tpu.dot_dimension_numbers<[1], [0], [0], [1], [0, 0, 1, 1], [], []>} : vector<16x16xbf16>, vector<16x128xbf16>, vector<16x128xf32> -> vector<16x128xf32>
    %c5 = arith.constant 5 : index
    %c0_22 = arith.constant 0 : index
    %c0_23 = arith.constant 0 : index
    %24 = vector.load %arg5[%c5, %c0_22, %c0_23] : memref<8x16x16xbf16, #tpu.memory_space<vmem>>, vector<1x16x16xbf16>
    %25 = vector.shape_cast %24 : vector<1x16x16xbf16> to vector<16x16xbf16>
    %cst_24 = arith.constant dense<0.000000e+00> : vector<16x128xf32>
    %26 = tpu.matmul %25, %8, %cst_24 {dimension_numbers = #tpu.dot_dimension_numbers<[1], [0], [0], [1], [0, 0, 1, 1], [], []>} : vector<16x16xbf16>, vector<16x128xbf16>, vector<16x128xf32> -> vector<16x128xf32>
    %c6 = arith.constant 6 : index
    %c0_25 = arith.constant 0 : index
    %c0_26 = arith.constant 0 : index
    %27 = vector.load %arg5[%c6, %c0_25, %c0_26] : memref<8x16x16xbf16, #tpu.memory_space<vmem>>, vector<1x16x16xbf16>
    %28 = vector.shape_cast %27 : vector<1x16x16xbf16> to vector<16x16xbf16>
    %cst_27 = arith.constant dense<0.000000e+00> : vector<16x128xf32>
    %29 = tpu.matmul %28, %8, %cst_27 {dimension_numbers = #tpu.dot_dimension_numbers<[1], [0], [0], [1], [0, 0, 1, 1], [], []>} : vector<16x16xbf16>, vector<16x128xbf16>, vector<16x128xf32> -> vector<16x128xf32>
    %c7 = arith.constant 7 : index
    %c0_28 = arith.constant 0 : index
    %c0_29 = arith.constant 0 : index
    %30 = vector.load %arg5[%c7, %c0_28, %c0_29] : memref<8x16x16xbf16, #tpu.memory_space<vmem>>, vector<1x16x16xbf16>
    %31 = vector.shape_cast %30 : vector<1x16x16xbf16> to vector<16x16xbf16>
    %cst_30 = arith.constant dense<0.000000e+00> : vector<16x128xf32>
    %32 = tpu.matmul %31, %8, %cst_30 {dimension_numbers = #tpu.dot_dimension_numbers<[1], [0], [0], [1], [0, 0, 1, 1], [], []>} : vector<16x16xbf16>, vector<16x128xbf16>, vector<16x128xf32> -> vector<16x128xf32>
    %33 = arith.truncf %7 : vector<16x128xf32> to vector<16x128xbf16>
    %c0_31 = arith.constant 0 : index
    %c0_32 = arith.constant 0 : index
    %34 = vector.load %arg1[%c0_31, %c0_32] : memref<128x128xbf16, #tpu.memory_space<vmem>>, vector<128x128xbf16>
    %cst_33 = arith.constant dense<0.000000e+00> : vector<16x128xf32>
    %35 = tpu.matmul %33, %34, %cst_33 {dimension_numbers = #tpu.dot_dimension_numbers<[1], [0], [0], [1], [0, 0, 1, 1], [], []>} : vector<16x128xbf16>, vector<128x128xbf16>, vector<16x128xf32> -> vector<16x128xf32>
    %c0_34 = arith.constant 0 : index
    %c0_35 = arith.constant 0 : index
    %c0_36 = arith.constant 0 : index
    %36 = vector.load %arg4[%c0_34, %c0_35, %c0_36] : memref<8x16x16xbf16, #tpu.memory_space<vmem>>, vector<1x16x16xbf16>
    %37 = vector.shape_cast %36 : vector<1x16x16xbf16> to vector<16x16xbf16>
    %38 = arith.truncf %35 : vector<16x128xf32> to vector<16x128xbf16>
    %cst_37 = arith.constant dense<0.000000e+00> : vector<16x128xf32>
    %39 = tpu.matmul %37, %38, %cst_37 {dimension_numbers = #tpu.dot_dimension_numbers<[1], [0], [0], [1], [0, 0, 1, 1], [], []>} : vector<16x16xbf16>, vector<16x128xbf16>, vector<16x128xf32> -> vector<16x128xf32>
    %40 = arith.addf %39, %11 : vector<16x128xf32>
    %cst_38 = arith.constant 0.000000e+00 : f32
    %41 = vector.broadcast %cst_38 : f32 to vector<16x128xf32>
    %42 = arith.maximumf %40, %41 : vector<16x128xf32>
    %43 = arith.truncf %42 : vector<16x128xf32> to vector<16x128xbf16>
    %c0_39 = arith.constant 0 : index
    %c0_40 = arith.constant 0 : index
    %44 = vector.load %arg1[%c0_39, %c0_40] : memref<128x128xbf16, #tpu.memory_space<vmem>>, vector<128x128xbf16>
    %cst_41 = arith.constant dense<0.000000e+00> : vector<16x128xf32>
    %45 = tpu.matmul %43, %44, %cst_41 {dimension_numbers = #tpu.dot_dimension_numbers<[1], [0], [0], [1], [0, 0, 1, 1], [], []>} : vector<16x128xbf16>, vector<128x128xbf16>, vector<16x128xf32> -> vector<16x128xf32>
    %c1_42 = arith.constant 1 : index
    %c0_43 = arith.constant 0 : index
    %c0_44 = arith.constant 0 : index
    %46 = vector.load %arg4[%c1_42, %c0_43, %c0_44] : memref<8x16x16xbf16, #tpu.memory_space<vmem>>, vector<1x16x16xbf16>
    %47 = vector.shape_cast %46 : vector<1x16x16xbf16> to vector<16x16xbf16>
    %48 = arith.truncf %45 : vector<16x128xf32> to vector<16x128xbf16>
    %cst_45 = arith.constant dense<0.000000e+00> : vector<16x128xf32>
    %49 = tpu.matmul %47, %48, %cst_45 {dimension_numbers = #tpu.dot_dimension_numbers<[1], [0], [0], [1], [0, 0, 1, 1], [], []>} : vector<16x16xbf16>, vector<16x128xbf16>, vector<16x128xf32> -> vector<16x128xf32>
    %50 = arith.addf %49, %14 : vector<16x128xf32>
    %cst_46 = arith.constant 0.000000e+00 : f32
    %51 = vector.broadcast %cst_46 : f32 to vector<16x128xf32>
    %52 = arith.maximumf %50, %51 : vector<16x128xf32>
    %53 = arith.truncf %52 : vector<16x128xf32> to vector<16x128xbf16>
    %c0_47 = arith.constant 0 : index
    %c0_48 = arith.constant 0 : index
    %54 = vector.load %arg1[%c0_47, %c0_48] : memref<128x128xbf16, #tpu.memory_space<vmem>>, vector<128x128xbf16>
    %cst_49 = arith.constant dense<0.000000e+00> : vector<16x128xf32>
    %55 = tpu.matmul %53, %54, %cst_49 {dimension_numbers = #tpu.dot_dimension_numbers<[1], [0], [0], [1], [0, 0, 1, 1], [], []>} : vector<16x128xbf16>, vector<128x128xbf16>, vector<16x128xf32> -> vector<16x128xf32>
    %c2_50 = arith.constant 2 : index
    %c0_51 = arith.constant 0 : index
    %c0_52 = arith.constant 0 : index
    %56 = vector.load %arg4[%c2_50, %c0_51, %c0_52] : memref<8x16x16xbf16, #tpu.memory_space<vmem>>, vector<1x16x16xbf16>
    %57 = vector.shape_cast %56 : vector<1x16x16xbf16> to vector<16x16xbf16>
    %58 = arith.truncf %55 : vector<16x128xf32> to vector<16x128xbf16>
    %cst_53 = arith.constant dense<0.000000e+00> : vector<16x128xf32>
    %59 = tpu.matmul %57, %58, %cst_53 {dimension_numbers = #tpu.dot_dimension_numbers<[1], [0], [0], [1], [0, 0, 1, 1], [], []>} : vector<16x16xbf16>, vector<16x128xbf16>, vector<16x128xf32> -> vector<16x128xf32>
    %60 = arith.addf %59, %17 : vector<16x128xf32>
    %cst_54 = arith.constant 0.000000e+00 : f32
    %61 = vector.broadcast %cst_54 : f32 to vector<16x128xf32>
    %62 = arith.maximumf %60, %61 : vector<16x128xf32>
    %63 = arith.truncf %62 : vector<16x128xf32> to vector<16x128xbf16>
    %c0_55 = arith.constant 0 : index
    %c0_56 = arith.constant 0 : index
    %64 = vector.load %arg1[%c0_55, %c0_56] : memref<128x128xbf16, #tpu.memory_space<vmem>>, vector<128x128xbf16>
    %cst_57 = arith.constant dense<0.000000e+00> : vector<16x128xf32>
    %65 = tpu.matmul %63, %64, %cst_57 {dimension_numbers = #tpu.dot_dimension_numbers<[1], [0], [0], [1], [0, 0, 1, 1], [], []>} : vector<16x128xbf16>, vector<128x128xbf16>, vector<16x128xf32> -> vector<16x128xf32>
    %c3_58 = arith.constant 3 : index
    %c0_59 = arith.constant 0 : index
    %c0_60 = arith.constant 0 : index
    %66 = vector.load %arg4[%c3_58, %c0_59, %c0_60] : memref<8x16x16xbf16, #tpu.memory_space<vmem>>, vector<1x16x16xbf16>
    %67 = vector.shape_cast %66 : vector<1x16x16xbf16> to vector<16x16xbf16>
    %68 = arith.truncf %65 : vector<16x128xf32> to vector<16x128xbf16>
    %cst_61 = arith.constant dense<0.000000e+00> : vector<16x128xf32>
    %69 = tpu.matmul %67, %68, %cst_61 {dimension_numbers = #tpu.dot_dimension_numbers<[1], [0], [0], [1], [0, 0, 1, 1], [], []>} : vector<16x16xbf16>, vector<16x128xbf16>, vector<16x128xf32> -> vector<16x128xf32>
    %70 = arith.addf %69, %20 : vector<16x128xf32>
    %cst_62 = arith.constant 0.000000e+00 : f32
    %71 = vector.broadcast %cst_62 : f32 to vector<16x128xf32>
    %72 = arith.maximumf %70, %71 : vector<16x128xf32>
    %73 = arith.truncf %72 : vector<16x128xf32> to vector<16x128xbf16>
    %c0_63 = arith.constant 0 : index
    %c0_64 = arith.constant 0 : index
    %74 = vector.load %arg1[%c0_63, %c0_64] : memref<128x128xbf16, #tpu.memory_space<vmem>>, vector<128x128xbf16>
    %cst_65 = arith.constant dense<0.000000e+00> : vector<16x128xf32>
    %75 = tpu.matmul %73, %74, %cst_65 {dimension_numbers = #tpu.dot_dimension_numbers<[1], [0], [0], [1], [0, 0, 1, 1], [], []>} : vector<16x128xbf16>, vector<128x128xbf16>, vector<16x128xf32> -> vector<16x128xf32>
    %c4_66 = arith.constant 4 : index
    %c0_67 = arith.constant 0 : index
    %c0_68 = arith.constant 0 : index
    %76 = vector.load %arg4[%c4_66, %c0_67, %c0_68] : memref<8x16x16xbf16, #tpu.memory_space<vmem>>, vector<1x16x16xbf16>
    %77 = vector.shape_cast %76 : vector<1x16x16xbf16> to vector<16x16xbf16>
    %78 = arith.truncf %75 : vector<16x128xf32> to vector<16x128xbf16>
    %cst_69 = arith.constant dense<0.000000e+00> : vector<16x128xf32>
    %79 = tpu.matmul %77, %78, %cst_69 {dimension_numbers = #tpu.dot_dimension_numbers<[1], [0], [0], [1], [0, 0, 1, 1], [], []>} : vector<16x16xbf16>, vector<16x128xbf16>, vector<16x128xf32> -> vector<16x128xf32>
    %80 = arith.addf %79, %23 : vector<16x128xf32>
    %cst_70 = arith.constant 0.000000e+00 : f32
    %81 = vector.broadcast %cst_70 : f32 to vector<16x128xf32>
    %82 = arith.maximumf %80, %81 : vector<16x128xf32>
    %83 = arith.truncf %82 : vector<16x128xf32> to vector<16x128xbf16>
    %c0_71 = arith.constant 0 : index
    %c0_72 = arith.constant 0 : index
    %84 = vector.load %arg1[%c0_71, %c0_72] : memref<128x128xbf16, #tpu.memory_space<vmem>>, vector<128x128xbf16>
    %cst_73 = arith.constant dense<0.000000e+00> : vector<16x128xf32>
    %85 = tpu.matmul %83, %84, %cst_73 {dimension_numbers = #tpu.dot_dimension_numbers<[1], [0], [0], [1], [0, 0, 1, 1], [], []>} : vector<16x128xbf16>, vector<128x128xbf16>, vector<16x128xf32> -> vector<16x128xf32>
    %c5_74 = arith.constant 5 : index
    %c0_75 = arith.constant 0 : index
    %c0_76 = arith.constant 0 : index
    %86 = vector.load %arg4[%c5_74, %c0_75, %c0_76] : memref<8x16x16xbf16, #tpu.memory_space<vmem>>, vector<1x16x16xbf16>
    %87 = vector.shape_cast %86 : vector<1x16x16xbf16> to vector<16x16xbf16>
    %88 = arith.truncf %85 : vector<16x128xf32> to vector<16x128xbf16>
    %cst_77 = arith.constant dense<0.000000e+00> : vector<16x128xf32>
    %89 = tpu.matmul %87, %88, %cst_77 {dimension_numbers = #tpu.dot_dimension_numbers<[1], [0], [0], [1], [0, 0, 1, 1], [], []>} : vector<16x16xbf16>, vector<16x128xbf16>, vector<16x128xf32> -> vector<16x128xf32>
    %90 = arith.addf %89, %26 : vector<16x128xf32>
    %cst_78 = arith.constant 0.000000e+00 : f32
    %91 = vector.broadcast %cst_78 : f32 to vector<16x128xf32>
    %92 = arith.maximumf %90, %91 : vector<16x128xf32>
    %93 = arith.truncf %92 : vector<16x128xf32> to vector<16x128xbf16>
    %c0_79 = arith.constant 0 : index
    %c0_80 = arith.constant 0 : index
    %94 = vector.load %arg1[%c0_79, %c0_80] : memref<128x128xbf16, #tpu.memory_space<vmem>>, vector<128x128xbf16>
    %cst_81 = arith.constant dense<0.000000e+00> : vector<16x128xf32>
    %95 = tpu.matmul %93, %94, %cst_81 {dimension_numbers = #tpu.dot_dimension_numbers<[1], [0], [0], [1], [0, 0, 1, 1], [], []>} : vector<16x128xbf16>, vector<128x128xbf16>, vector<16x128xf32> -> vector<16x128xf32>
    %c6_82 = arith.constant 6 : index
    %c0_83 = arith.constant 0 : index
    %c0_84 = arith.constant 0 : index
    %96 = vector.load %arg4[%c6_82, %c0_83, %c0_84] : memref<8x16x16xbf16, #tpu.memory_space<vmem>>, vector<1x16x16xbf16>
    %97 = vector.shape_cast %96 : vector<1x16x16xbf16> to vector<16x16xbf16>
    %98 = arith.truncf %95 : vector<16x128xf32> to vector<16x128xbf16>
    %cst_85 = arith.constant dense<0.000000e+00> : vector<16x128xf32>
    %99 = tpu.matmul %97, %98, %cst_85 {dimension_numbers = #tpu.dot_dimension_numbers<[1], [0], [0], [1], [0, 0, 1, 1], [], []>} : vector<16x16xbf16>, vector<16x128xbf16>, vector<16x128xf32> -> vector<16x128xf32>
    %100 = arith.addf %99, %29 : vector<16x128xf32>
    %cst_86 = arith.constant 0.000000e+00 : f32
    %101 = vector.broadcast %cst_86 : f32 to vector<16x128xf32>
    %102 = arith.maximumf %100, %101 : vector<16x128xf32>
    %103 = arith.truncf %102 : vector<16x128xf32> to vector<16x128xbf16>
    %c0_87 = arith.constant 0 : index
    %c0_88 = arith.constant 0 : index
    %104 = vector.load %arg1[%c0_87, %c0_88] : memref<128x128xbf16, #tpu.memory_space<vmem>>, vector<128x128xbf16>
    %cst_89 = arith.constant dense<0.000000e+00> : vector<16x128xf32>
    %105 = tpu.matmul %103, %104, %cst_89 {dimension_numbers = #tpu.dot_dimension_numbers<[1], [0], [0], [1], [0, 0, 1, 1], [], []>} : vector<16x128xbf16>, vector<128x128xbf16>, vector<16x128xf32> -> vector<16x128xf32>
    %c7_90 = arith.constant 7 : index
    %c0_91 = arith.constant 0 : index
    %c0_92 = arith.constant 0 : index
    %106 = vector.load %arg4[%c7_90, %c0_91, %c0_92] : memref<8x16x16xbf16, #tpu.memory_space<vmem>>, vector<1x16x16xbf16>
    %107 = vector.shape_cast %106 : vector<1x16x16xbf16> to vector<16x16xbf16>
    %108 = arith.truncf %105 : vector<16x128xf32> to vector<16x128xbf16>
    %cst_93 = arith.constant dense<0.000000e+00> : vector<16x128xf32>
    %109 = tpu.matmul %107, %108, %cst_93 {dimension_numbers = #tpu.dot_dimension_numbers<[1], [0], [0], [1], [0, 0, 1, 1], [], []>} : vector<16x16xbf16>, vector<16x128xbf16>, vector<16x128xf32> -> vector<16x128xf32>
    %110 = arith.addf %109, %32 : vector<16x128xf32>
    %cst_94 = arith.constant 0.000000e+00 : f32
    %111 = vector.broadcast %cst_94 : f32 to vector<16x128xf32>
    %112 = arith.maximumf %110, %111 : vector<16x128xf32>
    %c0_95 = arith.constant 0 : index
    %c0_96 = arith.constant 0 : index
    %113 = vector.load %arg6[%c0_95, %c0_96] : memref<2x16xbf16, #tpu.memory_space<vmem>>, vector<2x16xbf16>
    %114 = arith.truncf %112 : vector<16x128xf32> to vector<16x128xbf16>
    %cst_97 = arith.constant dense<0.000000e+00> : vector<2x128xf32>
    %115 = tpu.matmul %113, %114, %cst_97 {dimension_numbers = #tpu.dot_dimension_numbers<[1], [0], [0], [1], [0, 0, 1, 1], [], []>} : vector<2x16xbf16>, vector<16x128xbf16>, vector<2x128xf32> -> vector<2x128xf32>
    %c0_98 = arith.constant 0 : index
    %c0_99 = arith.constant 0 : index
    %116 = vector.load %arg7[%c0_98, %c0_99] : memref<2x1xf32, #tpu.memory_space<vmem>>, vector<2x1xf32>
    %117 = vector.broadcast %116 : vector<2x1xf32> to vector<2x128xf32>
    %118 = arith.addf %115, %117 : vector<2x128xf32>
    %c0_100 = arith.constant 0 : index
    %c0_101 = arith.constant 0 : index
    %119 = vector.load %arg8[%c0_100, %c0_101] : memref<2x128xf32, #tpu.memory_space<vmem>>, vector<2x128xf32>
    tpu.vector_store %arg8[%c0_100, %c0_101], %118 {strides = array<i32>} : memref<2x128xf32, #tpu.memory_space<vmem>>, vector<2x128xf32>,
    return
  }
}

</mosaic_0001>

<llo_original>
// kernel: net_forward.1
$region0: #{net_forward.1}
  #allocation0 [shape = 'u32[]', space=smem, size = 0x4, offset = 0x4, fixed_abs, tag = 'smem constant byte address 0x4 - core index']
  #allocation1 [shape = 'u32[144,128]{1,0:T(1,128)}', space=vmem, size = 0x12000, scoped, tag = 'internal scratch']
  %s0 = inlined_call_operand.vmem [shape: bf16[64,128], index: 0, kind: input, shape index: {}]
  %s1 = inlined_call_operand.vmem [shape: bf16[128,128], index: 1, kind: input, shape index: {}]
  %s2 = inlined_call_operand.vmem [shape: bf16[16,64], index: 2, kind: input, shape index: {}]
  %s3 = inlined_call_operand.vmem [shape: f32[16,1], index: 3, kind: input, shape index: {}]
  %s4 = inlined_call_operand.vmem [shape: bf16[8,16,16], index: 4, kind: input, shape index: {}]
  %s5 = inlined_call_operand.vmem [shape: bf16[8,16,16], index: 5, kind: input, shape index: {}]
  %s6 = inlined_call_operand.vmem [shape: bf16[2,16], index: 6, kind: input, shape index: {}]
  %s7 = inlined_call_operand.vmem [shape: f32[2,1], index: 7, kind: input, shape index: {}]
  %s8 = inlined_call_operand.vmem [shape: f32[2,128], index: 8, kind: output, shape index: {}]
  %s9 = sld [smem:[#allocation0]]
  $region42: #{net_forward.1} parent=0
    _
  %s11 = ssub.s32 1, %s9
  %s12 = scalar_select 0, %s11, %s9
  // Predicated region
  $region2: #{net_forward.1} parent=0 // pred_check
    _
  $region3: #{net_forward.1} parent=0 // pred_check_branch
    %14 = sbr.rel (0) target = $region5
  $region4: #{net_forward.1} parent=0 // pred_region
    _
  $region5: #{net_forward.1} parent=0 // pred_fallthru
    _
  // Predicated region
  $region6: #{net_forward.1} parent=0 // pred_check
    _
  $region7: #{net_forward.1} parent=0 // pred_check_branch
    %16 = sbr.rel (0) target = $region9
  $region8: #{net_forward.1} parent=0 // pred_region
    _
  $region9: #{net_forward.1} parent=0 // pred_fallthru
    _
  // Predicated region
  $region10: #{net_forward.1} parent=0 // pred_check
    _
  $region11: #{net_forward.1} parent=0 // pred_check_branch
    %18 = sbr.rel (0) target = $region13
  $region12: #{net_forward.1} parent=0 // pred_region
    _
  $region13: #{net_forward.1} parent=0 // pred_fallthru
    _
  // Predicated region
  $region14: #{net_forward.1} parent=0 // pred_check
    _
  $region15: #{net_forward.1} parent=0 // pred_check_branch
    %20 = sbr.rel (0) target = $region17
  $region16: #{net_forward.1} parent=0 // pred_region
    _
  $region17: #{net_forward.1} parent=0 // pred_fallthru
    _
  // Predicated region
  $region18: #{net_forward.1} parent=0 // pred_check
    _
  $region19: #{net_forward.1} parent=0 // pred_check_branch
    %22 = sbr.rel (0) target = $region21
  $region20: #{net_forward.1} parent=0 // pred_region
    _
  $region21: #{net_forward.1} parent=0 // pred_fallthru
    _
  // Predicated region
  $region22: #{net_forward.1} parent=0 // pred_check
    _
  $region23: #{net_forward.1} parent=0 // pred_check_branch
    %24 = sbr.rel (0) target = $region25
  $region24: #{net_forward.1} parent=0 // pred_region
    _
  $region25: #{net_forward.1} parent=0 // pred_fallthru
    _
  // Predicated region
  $region26: #{net_forward.1} parent=0 // pred_check
    _
  $region27: #{net_forward.1} parent=0 // pred_check_branch
    %26 = sbr.rel (0) target = $region29
  $region28: #{net_forward.1} parent=0 // pred_region
    _
  $region29: #{net_forward.1} parent=0 // pred_fallthru
    _
  // Predicated region
  $region30: #{net_forward.1} parent=0 // pred_check
    _
  $region31: #{net_forward.1} parent=0 // pred_check_branch
    %28 = sbr.rel (0) target = $region33
  $region32: #{net_forward.1} parent=0 // pred_region
    _
  $region33: #{net_forward.1} parent=0 // pred_fallthru
    _
  %v30 = vld [vmem:[%s2] sm:$0xf]
  %v31 = vld [vmem:[%s2 + $0x4] sm:$0xf]
  %v32 = vld [vmem:[%s0] sm:$0xf]
  %v33 = vld [vmem:[%s0 + $0x4] sm:$0xf]
  %v34 = vld [vmem:[%s0 + $0x8] sm:$0xf]
  %v35 = vld [vmem:[%s0 + $0xc] sm:$0xf]
  %v36 = vld [vmem:[%s0 + $0x10] sm:$0xf]
  %v37 = vld [vmem:[%s0 + $0x14] sm:$0xf]
  %v38 = vld [vmem:[%s0 + $0x18] sm:$0xf]
  %v39 = vld [vmem:[%s0 + $0x1c] sm:$0xf]
  %v40 = vld [vmem:[%s3] sm:$0xff]
  %v41 = vld [vmem:[%s3 + $0x8] sm:$0xff]
  %43 = vset.pattern.permute.xlu0 0
  %44 = vperm.xlu0 %43, %v40
  %v45 = vpop.permute.xlu0 %44
  %48 = vset.pattern.permute.xlu0 0
  %49 = vperm.xlu0 %48, %v41
  %v50 = vpop.permute.xlu0 %49
  %v54 = vunpack.c.l.b16 %v30
  %v55 = vunpack.c.l.b16 %v31
  %v56 = vpack.c.b16 %v55, %v54
  %v65 = vunpack.c.l.b16 %v32
  %v66 = vunpack.c.l.b16 %v33
  %v67 = vunpack.c.l.b16 %v34
  %v68 = vunpack.c.l.b16 %v35
  %v69 = vunpack.c.l.b16 %v36
  %v70 = vunpack.c.l.b16 %v37
  %v71 = vunpack.c.l.b16 %v38
  %v72 = vunpack.c.l.b16 %v39
  %v73 = vpack.c.b16 %v66, %v65
  %v74 = vpack.c.b16 %v68, %v67
  %v75 = vpack.c.b16 %v70, %v69
  %v76 = vpack.c.b16 %v72, %v71
  %vm81 = vcmask 523264
  %v83 = vsel %vm81, %v56, 0
  %85 = vmatprep.subr.bf16.mxu0 0
  %86 = vmatpush1.bf16.msra.mxu0 %v73
  %87 = vmatprep.subr.bf16.mxu0 0
  %88 = vmatpush1.bf16.msra.mxu0 %v74
  %89 = vmatprep.subr.bf16.mxu0 0
  %90 = vmatpush1.bf16.msra.mxu0 %v75
  %91 = vmatprep.subr.bf16.mxu0 0
  %92 = vmatpush1.bf16.msra.mxu0 %v76
  %93 = vmatprep.subr.bf16.mxu0 0
  %94 = vmatpush1.bf16.msra.mxu0 0
  %95 = vmatprep.subr.bf16.mxu0 0
  %96 = vmatpush1.bf16.msra.mxu0 0
  %97 = vmatprep.subr.bf16.mxu0 0
  %98 = vmatpush1.bf16.msra.mxu0 0
  %99 = vmatprep.subr.bf16.mxu0 0
  %100 = vmatpush1.bf16.msra.mxu0 0
  %101 = vmatprep.subr.bf16.mxu0 0
  %102 = vmatpush1.bf16.msra.mxu0 0
  %103 = vmatprep.subr.bf16.mxu0 0
  %104 = vmatpush1.bf16.msra.mxu0 0
  %105 = vmatprep.subr.bf16.mxu0 0
  %106 = vmatpush1.bf16.msra.mxu0 0
  %107 = vmatprep.subr.bf16.mxu0 0
  %108 = vmatpush1.bf16.msra.mxu0 0
  %109 = vmatprep.subr.bf16.mxu0 0
  %110 = vmatpush1.bf16.msra.mxu0 0
  %111 = vmatprep.subr.bf16.mxu0 0
  %112 = vmatpush1.bf16.msra.mxu0 0
  %113 = vmatprep.subr.bf16.mxu0 0
  %114 = vmatpush1.bf16.msra.mxu0 0
  %115 = vmatprep.subr.bf16.mxu0 0
  %116 = vmatpush1.bf16.msra.mxu0 0
  %117 = vmatprep.mubr.bf16.mxu0 0
  %118 = vmatmul.mubr.bf16.gmra.mrb[0].mxu0 %v83
  %v119 = vpop.f32.mrb[0].mxu0
  %v120 = vadd.f32 %v45, %v119
  %v121 = vpop.f32.mrb[0].mxu0
  %v122 = vpop.f32.mrb[0].mxu0
  %v123 = vadd.f32 %v50, %v122
  %v124 = vpop.f32.mrb[0].mxu0
  %125 = vdwg.mxu0
  %v126 = vmax.f32 %v120, 0.0
  %v127 = vmax.f32 %v123, 0.0
  %v128 = vpack.c.bf16 %v127, %v126
  %v129 = vld [vmem:[%s5] sm:$0xf]
  %v130 = vld [vmem:[%s5 + $0x4] sm:$0xf]
  %v133 = vunpack.c.l.b16 %v129
  %v134 = vunpack.c.l.b16 %v130
  %v135 = vpack.c.b16 %v134, %v133
  %vm136 = vcmask 130048
  %v138 = vsel %vm136, %v135, 0
  %140 = vmatprep.subr.bf16.mxu0 0
  %141 = vmatpush1.bf16.msra.mxu0 %v128
  %142 = vmatprep.subr.bf16.mxu0 0
  %143 = vmatpush1.bf16.msra.mxu0 0
  %144 = vmatprep.subr.bf16.mxu0 0
  %145 = vmatpush1.bf16.msra.mxu0 0
  %146 = vmatprep.subr.bf16.mxu0 0
  %147 = vmatpush1.bf16.msra.mxu0 0
  %148 = vmatprep.subr.bf16.mxu0 0
  %149 = vmatpush1.bf16.msra.mxu0 0
  %150 = vmatprep.subr.bf16.mxu0 0
  %151 = vmatpush1.bf16.msra.mxu0 0
  %152 = vmatprep.subr.bf16.mxu0 0
  %153 = vmatpush1.bf16.msra.mxu0 0
  %154 = vmatprep.subr.bf16.mxu0 0
  %155 = vmatpush1.bf16.msra.mxu0 0
  %156 = vmatprep.subr.bf16.mxu0 0
  %157 = vmatpush1.bf16.msra.mxu0 0
  %158 = vmatprep.subr.bf16.mxu0 0
  %159 = vmatpush1.bf16.msra.mxu0 0
  %160 = vmatprep.subr.bf16.mxu0 0
  %161 = vmatpush1.bf16.msra.mxu0 0
  %162 = vmatprep.subr.bf16.mxu0 0
  %163 = vmatpush1.bf16.msra.mxu0 0
  %164 = vmatprep.subr.bf16.mxu0 0
  %165 = vmatpush1.bf16.msra.mxu0 0
  %166 = vmatprep.subr.bf16.mxu0 0
  %167 = vmatpush1.bf16.msra.mxu0 0
  %168 = vmatprep.subr.bf16.mxu0 0
  %169 = vmatpush1.bf16.msra.mxu0 0
  %170 = vmatprep.subr.bf16.mxu0 0
  %171 = vmatpush1.bf16.msra.mxu0 0
  %172 = vmatprep.mubr.bf16.mxu0 0
  %173 = vmatmul.mubr.bf16.gmra.mrb[0].mxu0 %v138
  %v174 = vpop.f32.mrb[0].mxu0
  %v175 = vadd.f32 0.0, %v174
  %v176 = vpop.f32.mrb[0].mxu0
  %v177 = vpop.f32.mrb[0].mxu0
  %v178 = vadd.f32 0.0, %v177
  %v179 = vpop.f32.mrb[0].mxu0
  %180 = vdwg.mxu0
  %s181 = scalar_lea.vmem %s5, 8
  %v182 = vld [vmem:[%s181] sm:$0xf]
  %v183 = vld [vmem:[%s181 + $0x4] sm:$0xf]
  %v186 = vunpack.c.l.b16 %v182
  %v187 = vunpack.c.l.b16 %v183
  %v188 = vpack.c.b16 %v187, %v186
  %v190 = vsel %vm136, %v188, 0
  %192 = vmatprep.subr.bf16.mxu0 0
  %193 = vmatpush1.bf16.msra.mxu0 %v128
  %194 = vmatprep.subr.bf16.mxu0 0
  %195 = vmatpush1.bf16.msra.mxu0 0
  %196 = vmatprep.subr.bf16.mxu0 0
  %197 = vmatpush1.bf16.msra.mxu0 0
  %198 = vmatprep.subr.bf16.mxu0 0
  %199 = vmatpush1.bf16.msra.mxu0 0
  %200 = vmatprep.subr.bf16.mxu0 0
  %201 = vmatpush1.bf16.msra.mxu0 0
  %202 = vmatprep.subr.bf16.mxu0 0
  %203 = vmatpush1.bf16.msra.mxu0 0
  %204 = vmatprep.subr.bf16.mxu0 0
  %205 = vmatpush1.bf16.msra.mxu0 0
  %206 = vmatprep.subr.bf16.mxu0 0
  %207 = vmatpush1.bf16.msra.mxu0 0
  %208 = vmatprep.subr.bf16.mxu0 0
  %209 = vmatpush1.bf16.msra.mxu0 0
  %210 = vmatprep.subr.bf16.mxu0 0
  %211 = vmatpush1.bf16.msra.mxu0 0
  %212 = vmatprep.subr.bf16.mxu0 0
  %213 = vmatpush1.bf16.msra.mxu0 0
  %214 = vmatprep.subr.bf16.mxu0 0
  %215 = vmatpush1.bf16.msra.mxu0 0
  %216 = vmatprep.subr.bf16.mxu0 0
  %217 = vmatpush1.bf16.msra.mxu0 0
  %218 = vmatprep.subr.bf16.mxu0 0
  %219 = vmatpush1.bf16.msra.mxu0 0
  %220 = vmatprep.subr.bf16.mxu0 0
  %221 = vmatpush1.bf16.msra.mxu0 0
  %222 = vmatprep.subr.bf16.mxu0 0
  %223 = vmatpush1.bf16.msra.mxu0 0
  %224 = vmatprep.mubr.bf16.mxu0 0
  %225 = vmatmul.mubr.bf16.gmra.mrb[0].mxu0 %v190
  %v226 = vpop.f32.mrb[0].mxu0
  %v227 = vadd.f32 0.0, %v226
  %v228 = vpop.f32.mrb[0].mxu0
  %v229 = vpop.f32.mrb[0].mxu0
  %v230 = vadd.f32 0.0, %v229
  %v231 = vpop.f32.mrb[0].mxu0
  %232 = vdwg.mxu0
  %s233 = scalar_lea.vmem %s5, 16
  %v234 = vld [vmem:[%s233] sm:$0xf]
  %v235 = vld [vmem:[%s233 + $0x4] sm:$0xf]
  %v238 = vunpack.c.l.b16 %v234
  %v239 = vunpack.c.l.b16 %v235
  %v240 = vpack.c.b16 %v239, %v238
  %v242 = vsel %vm136, %v240, 0
  %244 = vmatprep.subr.bf16.mxu0 0
  %245 = vmatpush1.bf16.msra.mxu0 %v128
  %246 = vmatprep.subr.bf16.mxu0 0
  %247 = vmatpush1.bf16.msra.mxu0 0
  %248 = vmatprep.subr.bf16.mxu0 0
  %249 = vmatpush1.bf16.msra.mxu0 0
  %250 = vmatprep.subr.bf16.mxu0 0
  %251 = vmatpush1.bf16.msra.mxu0 0
  %252 = vmatprep.subr.bf16.mxu0 0
  %253 = vmatpush1.bf16.msra.mxu0 0
  %254 = vmatprep.subr.bf16.mxu0 0
  %255 = vmatpush1.bf16.msra.mxu0 0
  %256 = vmatprep.subr.bf16.mxu0 0
  %257 = vmatpush1.bf16.msra.mxu0 0
  %258 = vmatprep.subr.bf16.mxu0 0
  %259 = vmatpush1.bf16.msra.mxu0 0
  %260 = vmatprep.subr.bf16.mxu0 0
  %261 = vmatpush1.bf16.msra.mxu0 0
  %262 = vmatprep.subr.bf16.mxu0 0
  %263 = vmatpush1.bf16.msra.mxu0 0
  %264 = vmatprep.subr.bf16.mxu0 0
  %265 = vmatpush1.bf16.msra.mxu0 0
  %266 = vmatprep.subr.bf16.mxu0 0
  %267 = vmatpush1.bf16.msra.mxu0 0
  %268 = vmatprep.subr.bf16.mxu0 0
  %269 = vmatpush1.bf16.msra.mxu0 0
  %270 = vmatprep.subr.bf16.mxu0 0
  %271 = vmatpush1.bf16.msra.mxu0 0
  %272 = vmatprep.subr.bf16.mxu0 0
  %273 = vmatpush1.bf16.msra.mxu0 0
  %274 = vmatprep.subr.bf16.mxu0 0
  %275 = vmatpush1.bf16.msra.mxu0 0
  %276 = vmatprep.mubr.bf16.mxu0 0
  %277 = vmatmul.mubr.bf16.gmra.mrb[0].mxu0 %v242
  %v278 = vpop.f32.mrb[0].mxu0
  %v279 = vadd.f32 0.0, %v278
  %v280 = vpop.f32.mrb[0].mxu0
  %v281 = vpop.f32.mrb[0].mxu0
  %v282 = vadd.f32 0.0, %v281
  %v283 = vpop.f32.mrb[0].mxu0
  %284 = vdwg.mxu0
  %s285 = scalar_lea.vmem %s5, 24
  %v286 = vld [vmem:[%s285] sm:$0xf]
  %v287 = vld [vmem:[%s285 + $0x4] sm:$0xf]
  %v290 = vunpack.c.l.b16 %v286
  %v291 = vunpack.c.l.b16 %v287
  %v292 = vpack.c.b16 %v291, %v290
  %v294 = vsel %vm136, %v292, 0
  %296 = vmatprep.subr.bf16.mxu0 0
  %297 = vmatpush1.bf16.msra.mxu0 %v128
  %298 = vmatprep.subr.bf16.mxu0 0
  %299 = vmatpush1.bf16.msra.mxu0 0
  %300 = vmatprep.subr.bf16.mxu0 0
  %301 = vmatpush1.bf16.msra.mxu0 0
  %302 = vmatprep.subr.bf16.mxu0 0
  %303 = vmatpush1.bf16.msra.mxu0 0
  %304 = vmatprep.subr.bf16.mxu0 0
  %305 = vmatpush1.bf16.msra.mxu0 0
  %306 = vmatprep.subr.bf16.mxu0 0
  %307 = vmatpush1.bf16.msra.mxu0 0
  %308 = vmatprep.subr.bf16.mxu0 0
  %309 = vmatpush1.bf16.msra.mxu0 0
  %310 = vmatprep.subr.bf16.mxu0 0
  %311 = vmatpush1.bf16.msra.mxu0 0
  %312 = vmatprep.subr.bf16.mxu0 0
  %313 = vmatpush1.bf16.msra.mxu0 0
  %314 = vmatprep.subr.bf16.mxu0 0
  %315 = vmatpush1.bf16.msra.mxu0 0
  %316 = vmatprep.subr.bf16.mxu0 0
  %317 = vmatpush1.bf16.msra.mxu0 0
  %318 = vmatprep.subr.bf16.mxu0 0
  %319 = vmatpush1.bf16.msra.mxu0 0
  %320 = vmatprep.subr.bf16.mxu0 0
  %321 = vmatpush1.bf16.msra.mxu0 0
  %322 = vmatprep.subr.bf16.mxu0 0
  %323 = vmatpush1.bf16.msra.mxu0 0
  %324 = vmatprep.subr.bf16.mxu0 0
  %325 = vmatpush1.bf16.msra.mxu0 0
  %326 = vmatprep.subr.bf16.mxu0 0
  %327 = vmatpush1.bf16.msra.mxu0 0
  %328 = vmatprep.mubr.bf16.mxu0 0
  %329 = vmatmul.mubr.bf16.gmra.mrb[0].mxu0 %v294
  %v330 = vpop.f32.mrb[0].mxu0
  %v331 = vadd.f32 0.0, %v330
  %v332 = vpop.f32.mrb[0].mxu0
  %v333 = vpop.f32.mrb[0].mxu0
  %v334 = vadd.f32 0.0, %v333
  %v335 = vpop.f32.mrb[0].mxu0
  %336 = vdwg.mxu0
  %s337 = scalar_lea.vmem %s5, 32
  %v338 = vld [vmem:[%s337] sm:$0xf]
  %v339 = vld [vmem:[%s337 + $0x4] sm:$0xf]
  %v342 = vunpack.c.l.b16 %v338
  %v343 = vunpack.c.l.b16 %v339
  %v344 = vpack.c.b16 %v343, %v342
  %v346 = vsel %vm136, %v344, 0
  %348 = vmatprep.subr.bf16.mxu0 0
  %349 = vmatpush1.bf16.msra.mxu0 %v128
  %350 = vmatprep.subr.bf16.mxu0 0
  %351 = vmatpush1.bf16.msra.mxu0 0
  %352 = vmatprep.subr.bf16.mxu0 0
  %353 = vmatpush1.bf16.msra.mxu0 0
  %354 = vmatprep.subr.bf16.mxu0 0
  %355 = vmatpush1.bf16.msra.mxu0 0
  %356 = vmatprep.subr.bf16.mxu0 0
  %357 = vmatpush1.bf16.msra.mxu0 0
  %358 = vmatprep.subr.bf16.mxu0 0
  %359 = vmatpush1.bf16.msra.mxu0 0
  %360 = vmatprep.subr.bf16.mxu0 0
  %361 = vmatpush1.bf16.msra.mxu0 0
  %362 = vmatprep.subr.bf16.mxu0 0
  %363 = vmatpush1.bf16.msra.mxu0 0
  %364 = vmatprep.subr.bf16.mxu0 0
  %365 = vmatpush1.bf16.msra.mxu0 0
  %366 = vmatprep.subr.bf16.mxu0 0
  %367 = vmatpush1.bf16.msra.mxu0 0
  %368 = vmatprep.subr.bf16.mxu0 0
  %369 = vmatpush1.bf16.msra.mxu0 0
  %370 = vmatprep.subr.bf16.mxu0 0
  %371 = vmatpush1.bf16.msra.mxu0 0
  %372 = vmatprep.subr.bf16.mxu0 0
  %373 = vmatpush1.bf16.msra.mxu0 0
  %374 = vmatprep.subr.bf16.mxu0 0
  %375 = vmatpush1.bf16.msra.mxu0 0
  %376 = vmatprep.subr.bf16.mxu0 0
  %377 = vmatpush1.bf16.msra.mxu0 0
  %378 = vmatprep.subr.bf16.mxu0 0
  %379 = vmatpush1.bf16.msra.mxu0 0
  %380 = vmatprep.mubr.bf16.mxu0 0
  %381 = vmatmul.mubr.bf16.gmra.mrb[0].mxu0 %v346
  %v382 = vpop.f32.mrb[0].mxu0
  %v383 = vadd.f32 0.0, %v382
  %v384 = vpop.f32.mrb[0].mxu0
  %v385 = vpop.f32.mrb[0].mxu0
  %v386 = vadd.f32 0.0, %v385
  %v387 = vpop.f32.mrb[0].mxu0
  %388 = vdwg.mxu0
  %s389 = scalar_lea.vmem %s5, 40
  %v390 = vld [vmem:[%s389] sm:$0xf]
  %v391 = vld [vmem:[%s389 + $0x4] sm:$0xf]
  %v394 = vunpack.c.l.b16 %v390
  %v395 = vunpack.c.l.b16 %v391
  %v396 = vpack.c.b16 %v395, %v394
  %v398 = vsel %vm136, %v396, 0
  %400 = vmatprep.subr.bf16.mxu0 0
  %401 = vmatpush1.bf16.msra.mxu0 %v128
  %402 = vmatprep.subr.bf16.mxu0 0
  %403 = vmatpush1.bf16.msra.mxu0 0
  %404 = vmatprep.subr.bf16.mxu0 0
  %405 = vmatpush1.bf16.msra.mxu0 0
  %406 = vmatprep.subr.bf16.mxu0 0
  %407 = vmatpush1.bf16.msra.mxu0 0
  %408 = vmatprep.subr.bf16.mxu0 0
  %409 = vmatpush1.bf16.msra.mxu0 0
  %410 = vmatprep.subr.bf16.mxu0 0
  %411 = vmatpush1.bf16.msra.mxu0 0
  %412 = vmatprep.subr.bf16.mxu0 0
  %413 = vmatpush1.bf16.msra.mxu0 0
  %414 = vmatprep.subr.bf16.mxu0 0
  %415 = vmatpush1.bf16.msra.mxu0 0
  %416 = vmatprep.subr.bf16.mxu0 0
  %417 = vmatpush1.bf16.msra.mxu0 0
  %418 = vmatprep.subr.bf16.mxu0 0
  %419 = vmatpush1.bf16.msra.mxu0 0
  %420 = vmatprep.subr.bf16.mxu0 0
  %421 = vmatpush1.bf16.msra.mxu0 0
  %422 = vmatprep.subr.bf16.mxu0 0
  %423 = vmatpush1.bf16.msra.mxu0 0
  %424 = vmatprep.subr.bf16.mxu0 0
  %425 = vmatpush1.bf16.msra.mxu0 0
  %426 = vmatprep.subr.bf16.mxu0 0
  %427 = vmatpush1.bf16.msra.mxu0 0
  %428 = vmatprep.subr.bf16.mxu0 0
  %429 = vmatpush1.bf16.msra.mxu0 0
  %430 = vmatprep.subr.bf16.mxu0 0
  %431 = vmatpush1.bf16.msra.mxu0 0
  %432 = vmatprep.mubr.bf16.mxu0 0
  %433 = vmatmul.mubr.bf16.gmra.mrb[0].mxu0 %v398
  %v434 = vpop.f32.mrb[0].mxu0
  %v435 = vadd.f32 0.0, %v434
  %v436 = vpop.f32.mrb[0].mxu0
  %v437 = vpop.f32.mrb[0].mxu0
  %v438 = vadd.f32 0.0, %v437
  %v439 = vpop.f32.mrb[0].mxu0
  %440 = vdwg.mxu0
  %s441 = scalar_lea.vmem %s5, 48
  %v442 = vld [vmem:[%s441] sm:$0xf]
  %v443 = vld [vmem:[%s441 + $0x4] sm:$0xf]
  %v446 = vunpack.c.l.b16 %v442
  %v447 = vunpack.c.l.b16 %v443
  %v448 = vpack.c.b16 %v447, %v446
  %v450 = vsel %vm136, %v448, 0
  %452 = vmatprep.subr.bf16.mxu0 0
  %453 = vmatpush1.bf16.msra.mxu0 %v128
  %454 = vmatprep.subr.bf16.mxu0 0
  %455 = vmatpush1.bf16.msra.mxu0 0
  %456 = vmatprep.subr.bf16.mxu0 0
  %457 = vmatpush1.bf16.msra.mxu0 0
  %458 = vmatprep.subr.bf16.mxu0 0
  %459 = vmatpush1.bf16.msra.mxu0 0
  %460 = vmatprep.subr.bf16.mxu0 0
  %461 = vmatpush1.bf16.msra.mxu0 0
  %462 = vmatprep.subr.bf16.mxu0 0
  %463 = vmatpush1.bf16.msra.mxu0 0
  %464 = vmatprep.subr.bf16.mxu0 0
  %465 = vmatpush1.bf16.msra.mxu0 0
  %466 = vmatprep.subr.bf16.mxu0 0
  %467 = vmatpush1.bf16.msra.mxu0 0
  %468 = vmatprep.subr.bf16.mxu0 0
  %469 = vmatpush1.bf16.msra.mxu0 0
  %470 = vmatprep.subr.bf16.mxu0 0
  %471 = vmatpush1.bf16.msra.mxu0 0
  %472 = vmatprep.subr.bf16.mxu0 0
  %473 = vmatpush1.bf16.msra.mxu0 0
  %474 = vmatprep.subr.bf16.mxu0 0
  %475 = vmatpush1.bf16.msra.mxu0 0
  %476 = vmatprep.subr.bf16.mxu0 0
  %477 = vmatpush1.bf16.msra.mxu0 0
  %478 = vmatprep.subr.bf16.mxu0 0
  %479 = vmatpush1.bf16.msra.mxu0 0
  %480 = vmatprep.subr.bf16.mxu0 0
  %481 = vmatpush1.bf16.msra.mxu0 0
  %482 = vmatprep.subr.bf16.mxu0 0
  %483 = vmatpush1.bf16.msra.mxu0 0
  %484 = vmatprep.mubr.bf16.mxu0 0
  %485 = vmatmul.mubr.bf16.gmra.mrb[0].mxu0 %v450
  %v486 = vpop.f32.mrb[0].mxu0
  %v487 = vadd.f32 0.0, %v486
  %v488 = vpop.f32.mrb[0].mxu0
  %v489 = vpop.f32.mrb[0].mxu0
  %v490 = vadd.f32 0.0, %v489
  %v491 = vpop.f32.mrb[0].mxu0
  %492 = vdwg.mxu0
  %s493 = scalar_lea.vmem %s5, 56
  %v494 = vld [vmem:[%s493] sm:$0xf]
  %v495 = vld [vmem:[%s493 + $0x4] sm:$0xf]
  %v498 = vunpack.c.l.b16 %v494
  %v499 = vunpack.c.l.b16 %v495
  %v500 = vpack.c.b16 %v499, %v498
  %v502 = vsel %vm136, %v500, 0
  %504 = vmatprep.subr.bf16.mxu0 0
  %505 = vmatpush1.bf16.msra.mxu0 %v128
  %506 = vmatprep.subr.bf16.mxu0 0
  %507 = vmatpush1.bf16.msra.mxu0 0
  %508 = vmatprep.subr.bf16.mxu0 0
  %509 = vmatpush1.bf16.msra.mxu0 0
  %510 = vmatprep.subr.bf16.mxu0 0
  %511 = vmatpush1.bf16.msra.mxu0 0
  %512 = vmatprep.subr.bf16.mxu0 0
  %513 = vmatpush1.bf16.msra.mxu0 0
  %514 = vmatprep.subr.bf16.mxu0 0
  %515 = vmatpush1.bf16.msra.mxu0 0
  %516 = vmatprep.subr.bf16.mxu0 0
  %517 = vmatpush1.bf16.msra.mxu0 0
  %518 = vmatprep.subr.bf16.mxu0 0
  %519 = vmatpush1.bf16.msra.mxu0 0
  %520 = vmatprep.subr.bf16.mxu0 0
  %521 = vmatpush1.bf16.msra.mxu0 0
  %522 = vmatprep.subr.bf16.mxu0 0
  %523 = vmatpush1.bf16.msra.mxu0 0
  %524 = vmatprep.subr.bf16.mxu0 0
  %525 = vmatpush1.bf16.msra.mxu0 0
  %526 = vmatprep.subr.bf16.mxu0 0
  %527 = vmatpush1.bf16.msra.mxu0 0
  %528 = vmatprep.subr.bf16.mxu0 0
  %529 = vmatpush1.bf16.msra.mxu0 0
  %530 = vmatprep.subr.bf16.mxu0 0
  %531 = vmatpush1.bf16.msra.mxu0 0
  %532 = vmatprep.subr.bf16.mxu0 0
  %533 = vmatpush1.bf16.msra.mxu0 0
  %534 = vmatprep.subr.bf16.mxu0 0
  %535 = vmatpush1.bf16.msra.mxu0 0
  %536 = vmatprep.mubr.bf16.mxu0 0
  %537 = vmatmul.mubr.bf16.gmra.mrb[0].mxu0 %v502
  %v538 = vpop.f32.mrb[0].mxu0
  %v539 = vadd.f32 0.0, %v538
  %v540 = vpop.f32.mrb[0].mxu0
  %v541 = vpop.f32.mrb[0].mxu0
  %v542 = vadd.f32 0.0, %v541
  %v543 = vpop.f32.mrb[0].mxu0
  %544 = vdwg.mxu0
  %v545 = vld [vmem:[%s1] sm:$0xf]
  %v546 = vld [vmem:[%s1 + $0x4] sm:$0xf]
  %v547 = vld [vmem:[%s1 + $0x8] sm:$0xf]
  %v548 = vld [vmem:[%s1 + $0xc] sm:$0xf]
  %v549 = vld [vmem:[%s1 + $0x10] sm:$0xf]
  %v550 = vld [vmem:[%s1 + $0x14] sm:$0xf]
  %v551 = vld [vmem:[%s1 + $0x18] sm:$0xf]
  %v552 = vld [vmem:[%s1 + $0x1c] sm:$0xf]
  %v553 = vld [vmem:[%s1 + $0x20] sm:$0xf]
  %v554 = vld [vmem:[%s1 + $0x24] sm:$0xf]
  %v555 = vld [vmem:[%s1 + $0x28] sm:$0xf]
  %v556 = vld [vmem:[%s1 + $0x2c] sm:$0xf]
  %v557 = vld [vmem:[%s1 + $0x30] sm:$0xf]
  %v558 = vld [vmem:[%s1 + $0x34] sm:$0xf]
  %v559 = vld [vmem:[%s1 + $0x38] sm:$0xf]
  %v560 = vld [vmem:[%s1 + $0x3c] sm:$0xf]
  %v577 = vunpack.c.l.b16 %v545
  %v578 = vunpack.c.l.b16 %v546
  %v579 = vunpack.c.l.b16 %v547
  %v580 = vunpack.c.l.b16 %v548
  %v581 = vunpack.c.l.b16 %v549
  %v582 = vunpack.c.l.b16 %v550
  %v583 = vunpack.c.l.b16 %v551
  %v584 = vunpack.c.l.b16 %v552
  %v585 = vunpack.c.l.b16 %v553
  %v586 = vunpack.c.l.b16 %v554
  %v587 = vunpack.c.l.b16 %v555
  %v588 = vunpack.c.l.b16 %v556
  %v589 = vunpack.c.l.b16 %v557
  %v590 = vunpack.c.l.b16 %v558
  %v591 = vunpack.c.l.b16 %v559
  %v592 = vunpack.c.l.b16 %v560
  %v593 = vpack.c.b16 %v578, %v577
  %v594 = vpack.c.b16 %v580, %v579
  %v595 = vpack.c.b16 %v582, %v581
  %v596 = vpack.c.b16 %v584, %v583
  %v597 = vpack.c.b16 %v586, %v585
  %v598 = vpack.c.b16 %v588, %v587
  %v599 = vpack.c.b16 %v590, %v589
  %v600 = vpack.c.b16 %v592, %v591
  %609 = vmatprep.subr.bf16.mxu0 0
  %610 = vmatpush1.bf16.msra.mxu0 %v593
  %611 = vmatprep.subr.bf16.mxu0 0
  %612 = vmatpush1.bf16.msra.mxu0 %v594
  %613 = vmatprep.subr.bf16.mxu0 0
  %614 = vmatpush1.bf16.msra.mxu0 %v595
  %615 = vmatprep.subr.bf16.mxu0 0
  %616 = vmatpush1.bf16.msra.mxu0 %v596
  %617 = vmatprep.subr.bf16.mxu0 0
  %618 = vmatpush1.bf16.msra.mxu0 %v597
  %619 = vmatprep.subr.bf16.mxu0 0
  %620 = vmatpush1.bf16.msra.mxu0 %v598
  %621 = vmatprep.subr.bf16.mxu0 0
  %622 = vmatpush1.bf16.msra.mxu0 %v599
  %623 = vmatprep.subr.bf16.mxu0 0
  %624 = vmatpush1.bf16.msra.mxu0 %v600
  %625 = vmatprep.subr.bf16.mxu0 0
  %626 = vmatpush1.bf16.msra.mxu0 0
  %627 = vmatprep.subr.bf16.mxu0 0
  %628 = vmatpush1.bf16.msra.mxu0 0
  %629 = vmatprep.subr.bf16.mxu0 0
  %630 = vmatpush1.bf16.msra.mxu0 0
  %631 = vmatprep.subr.bf16.mxu0 0
  %632 = vmatpush1.bf16.msra.mxu0 0
  %633 = vmatprep.subr.bf16.mxu0 0
  %634 = vmatpush1.bf16.msra.mxu0 0
  %635 = vmatprep.subr.bf16.mxu0 0
  %636 = vmatpush1.bf16.msra.mxu0 0
  %637 = vmatprep.subr.bf16.mxu0 0
  %638 = vmatpush1.bf16.msra.mxu0 0
  %639 = vmatprep.subr.bf16.mxu0 0
  %640 = vmatpush1.bf16.msra.mxu0 0
  %641 = vmatprep.mubr.bf16.mxu0 0
  %642 = vmatmul.mubr.bf16.gmra.mrb[0].mxu0 %v128
  %v643 = vpop.f32.mrb[0].mxu0
  %v644 = vadd.f32 0.0, %v643
  %v645 = vpop.f32.mrb[0].mxu0
  %v646 = vpop.f32.mrb[0].mxu0
  %v647 = vadd.f32 0.0, %v646
  %v648 = vpop.f32.mrb[0].mxu0
  %649 = vdwg.mxu0
  %v650 = vld [vmem:[%s4] sm:$0xf]
  %v651 = vld [vmem:[%s4 + $0x4] sm:$0xf]
  %v652 = vpack.c.bf16 %v647, %v644
  %v655 = vunpack.c.l.b16 %v650
  %v656 = vunpack.c.l.b16 %v651
  %v657 = vpack.c.b16 %v656, %v655
  %v659 = vsel %vm136, %v657, 0
  %661 = vmatprep.subr.bf16.mxu0 0
  %662 = vmatpush1.bf16.msra.mxu0 %v652
  %663 = vmatprep.subr.bf16.mxu0 0
  %664 = vmatpush1.bf16.msra.mxu0 0
  %665 = vmatprep.subr.bf16.mxu0 0
  %666 = vmatpush1.bf16.msra.mxu0 0
  %667 = vmatprep.subr.bf16.mxu0 0
  %668 = vmatpush1.bf16.msra.mxu0 0
  %669 = vmatprep.subr.bf16.mxu0 0
  %670 = vmatpush1.bf16.msra.mxu0 0
  %671 = vmatprep.subr.bf16.mxu0 0
  %672 = vmatpush1.bf16.msra.mxu0 0
  %673 = vmatprep.subr.bf16.mxu0 0
  %674 = vmatpush1.bf16.msra.mxu0 0
  %675 = vmatprep.subr.bf16.mxu0 0
  %676 = vmatpush1.bf16.msra.mxu0 0
  %677 = vmatprep.subr.bf16.mxu0 0
  %678 = vmatpush1.bf16.msra.mxu0 0
  %679 = vmatprep.subr.bf16.mxu0 0
  %680 = vmatpush1.bf16.msra.mxu0 0
  %681 = vmatprep.subr.bf16.mxu0 0
  %682 = vmatpush1.bf16.msra.mxu0 0
  %683 = vmatprep.subr.bf16.mxu0 0
  %684 = vmatpush1.bf16.msra.mxu0 0
  %685 = vmatprep.subr.bf16.mxu0 0
  %686 = vmatpush1.bf16.msra.mxu0 0
  %687 = vmatprep.subr.bf16.mxu0 0
  %688 = vmatpush1.bf16.msra.mxu0 0
  %689 = vmatprep.subr.bf16.mxu0 0
  %690 = vmatpush1.bf16.msra.mxu0 0
  %691 = vmatprep.subr.bf16.mxu0 0
  %692 = vmatpush1.bf16.msra.mxu0 0
  %693 = vmatprep.mubr.bf16.mxu0 0
  %694 = vmatmul.mubr.bf16.gmra.mrb[0].mxu0 %v659
  %v695 = vpop.f32.mrb[0].mxu0
  %v696 = vadd.f32 %v175, %v695
  %v697 = vpop.f32.mrb[0].mxu0
  %v698 = vpop.f32.mrb[0].mxu0
  %v699 = vadd.f32 %v178, %v698
  %v700 = vpop.f32.mrb[0].mxu0
  %701 = vdwg.mxu0
  %v702 = vmax.f32 %v696, 0.0
  %v703 = vmax.f32 %v699, 0.0
  %v704 = vpack.c.bf16 %v703, %v702
  %705 = vmatprep.subr.bf16.mxu0 0
  %706 = vmatpush1.bf16.msra.mxu0 %v593
  %707 = vmatprep.subr.bf16.mxu0 0
  %708 = vmatpush1.bf16.msra.mxu0 %v594
  %709 = vmatprep.subr.bf16.mxu0 0
  %710 = vmatpush1.bf16.msra.mxu0 %v595
  %711 = vmatprep.subr.bf16.mxu0 0
  %712 = vmatpush1.bf16.msra.mxu0 %v596
  %713 = vmatprep.subr.bf16.mxu0 0
  %714 = vmatpush1.bf16.msra.mxu0 %v597
  %715 = vmatprep.subr.bf16.mxu0 0
  %716 = vmatpush1.bf16.msra.mxu0 %v598
  %717 = vmatprep.subr.bf16.mxu0 0
  %718 = vmatpush1.bf16.msra.mxu0 %v599
  %719 = vmatprep.subr.bf16.mxu0 0
  %720 = vmatpush1.bf16.msra.mxu0 %v600
  %721 = vmatprep.subr.bf16.mxu0 0
  %722 = vmatpush1.bf16.msra.mxu0 0
  %723 = vmatprep.subr.bf16.mxu0 0
  %724 = vmatpush1.bf16.msra.mxu0 0
  %725 = vmatprep.subr.bf16.mxu0 0
  %726 = vmatpush1.bf16.msra.mxu0 0
  %727 = vmatprep.subr.bf16.mxu0 0
  %728 = vmatpush1.bf16.msra.mxu0 0
  %729 = vmatprep.subr.bf16.mxu0 0
  %730 = vmatpush1.bf16.msra.mxu0 0
  %731 = vmatprep.subr.bf16.mxu0 0
  %732 = vmatpush1.bf16.msra.mxu0 0
  %733 = vmatprep.subr.bf16.mxu0 0
  %734 = vmatpush1.bf16.msra.mxu0 0
  %735 = vmatprep.subr.bf16.mxu0 0
  %736 = vmatpush1.bf16.msra.mxu0 0
  %737 = vmatprep.mubr.bf16.mxu0 0
  %738 = vmatmul.mubr.bf16.gmra.mrb[0].mxu0 %v704
  %v739 = vpop.f32.mrb[0].mxu0
  %v740 = vadd.f32 0.0, %v739
  %v741 = vpop.f32.mrb[0].mxu0
  %v742 = vpop.f32.mrb[0].mxu0
  %v743 = vadd.f32 0.0, %v742
  %v744 = vpop.f32.mrb[0].mxu0
  %745 = vdwg.mxu0
  %s746 = scalar_lea.vmem %s4, 8
  %v747 = vld [vmem:[%s746] sm:$0xf]
  %v748 = vld [vmem:[%s746 + $0x4] sm:$0xf]
  %v749 = vpack.c.bf16 %v743, %v740
  %v752 = vunpack.c.l.b16 %v747
  %v753 = vunpack.c.l.b16 %v748
  %v754 = vpack.c.b16 %v753, %v752
  %v756 = vsel %vm136, %v754, 0
  %758 = vmatprep.subr.bf16.mxu0 0
  %759 = vmatpush1.bf16.msra.mxu0 %v749
  %760 = vmatprep.subr.bf16.mxu0 0
  %761 = vmatpush1.bf16.msra.mxu0 0
  %762 = vmatprep.subr.bf16.mxu0 0
  %763 = vmatpush1.bf16.msra.mxu0 0
  %764 = vmatprep.subr.bf16.mxu0 0
  %765 = vmatpush1.bf16.msra.mxu0 0
  %766 = vmatprep.subr.bf16.mxu0 0
  %767 = vmatpush1.bf16.msra.mxu0 0
  %768 = vmatprep.subr.bf16.mxu0 0
  %769 = vmatpush1.bf16.msra.mxu0 0
  %770 = vmatprep.subr.bf16.mxu0 0
  %771 = vmatpush1.bf16.msra.mxu0 0
  %772 = vmatprep.subr.bf16.mxu0 0
  %773 = vmatpush1.bf16.msra.mxu0 0
  %774 = vmatprep.subr.bf16.mxu0 0
  %775 = vmatpush1.bf16.msra.mxu0 0
  %776 = vmatprep.subr.bf16.mxu0 0
  %777 = vmatpush1.bf16.msra.mxu0 0
  %778 = vmatprep.subr.bf16.mxu0 0
  %779 = vmatpush1.bf16.msra.mxu0 0
  %780 = vmatprep.subr.bf16.mxu0 0
  %781 = vmatpush1.bf16.msra.mxu0 0
  %782 = vmatprep.subr.bf16.mxu0 0
  %783 = vmatpush1.bf16.msra.mxu0 0
  %784 = vmatprep.subr.bf16.mxu0 0
  %785 = vmatpush1.bf16.msra.mxu0 0
  %786 = vmatprep.subr.bf16.mxu0 0
  %787 = vmatpush1.bf16.msra.mxu0 0
  %788 = vmatprep.subr.bf16.mxu0 0
  %789 = vmatpush1.bf16.msra.mxu0 0
  %790 = vmatprep.mubr.bf16.mxu0 0
  %791 = vmatmul.mubr.bf16.gmra.mrb[0].mxu0 %v756
  %v792 = vpop.f32.mrb[0].mxu0
  %v793 = vadd.f32 %v227, %v792
  %v794 = vpop.f32.mrb[0].mxu0
  %v795 = vpop.f32.mrb[0].mxu0
  %v796 = vadd.f32 %v230, %v795
  %v797 = vpop.f32.mrb[0].mxu0
  %798 = vdwg.mxu0
  %v799 = vmax.f32 %v793, 0.0
  %v800 = vmax.f32 %v796, 0.0
  %v801 = vpack.c.bf16 %v800, %v799
  %802 = vmatprep.subr.bf16.mxu0 0
  %803 = vmatpush1.bf16.msra.mxu0 %v593
  %804 = vmatprep.subr.bf16.mxu0 0
  %805 = vmatpush1.bf16.msra.mxu0 %v594
  %806 = vmatprep.subr.bf16.mxu0 0
  %807 = vmatpush1.bf16.msra.mxu0 %v595
  %808 = vmatprep.subr.bf16.mxu0 0
  %809 = vmatpush1.bf16.msra.mxu0 %v596
  %810 = vmatprep.subr.bf16.mxu0 0
  %811 = vmatpush1.bf16.msra.mxu0 %v597
  %812 = vmatprep.subr.bf16.mxu0 0
  %813 = vmatpush1.bf16.msra.mxu0 %v598
  %814 = vmatprep.subr.bf16.mxu0 0
  %815 = vmatpush1.bf16.msra.mxu0 %v599
  %816 = vmatprep.subr.bf16.mxu0 0
  %817 = vmatpush1.bf16.msra.mxu0 %v600
  %818 = vmatprep.subr.bf16.mxu0 0
  %819 = vmatpush1.bf16.msra.mxu0 0
  %820 = vmatprep.subr.bf16.mxu0 0
  %821 = vmatpush1.bf16.msra.mxu0 0
  %822 = vmatprep.subr.bf16.mxu0 0
  %823 = vmatpush1.bf16.msra.mxu0 0
  %824 = vmatprep.subr.bf16.mxu0 0
  %825 = vmatpush1.bf16.msra.mxu0 0
  %826 = vmatprep.subr.bf16.mxu0 0
  %827 = vmatpush1.bf16.msra.mxu0 0
  %828 = vmatprep.subr.bf16.mxu0 0
  %829 = vmatpush1.bf16.msra.mxu0 0
  %830 = vmatprep.subr.bf16.mxu0 0
  %831 = vmatpush1.bf16.msra.mxu0 0
  %832 = vmatprep.subr.bf16.mxu0 0
  %833 = vmatpush1.bf16.msra.mxu0 0
  %834 = vmatprep.mubr.bf16.mxu0 0
  %835 = vmatmul.mubr.bf16.gmra.mrb[0].mxu0 %v801
  %v836 = vpop.f32.mrb[0].mxu0
  %v837 = vadd.f32 0.0, %v836
  %v838 = vpop.f32.mrb[0].mxu0
  %v839 = vpop.f32.mrb[0].mxu0
  %v840 = vadd.f32 0.0, %v839
  %v841 = vpop.f32.mrb[0].mxu0
  %842 = vdwg.mxu0
  %s843 = scalar_lea.vmem %s4, 16
  %v844 = vld [vmem:[%s843] sm:$0xf]
  %v845 = vld [vmem:[%s843 + $0x4] sm:$0xf]
  %v846 = vpack.c.bf16 %v840, %v837
  %v849 = vunpack.c.l.b16 %v844
  %v850 = vunpack.c.l.b16 %v845
  %v851 = vpack.c.b16 %v850, %v849
  %v853 = vsel %vm136, %v851, 0
  %855 = vmatprep.subr.bf16.mxu0 0
  %856 = vmatpush1.bf16.msra.mxu0 %v846
  %857 = vmatprep.subr.bf16.mxu0 0
  %858 = vmatpush1.bf16.msra.mxu0 0
  %859 = vmatprep.subr.bf16.mxu0 0
  %860 = vmatpush1.bf16.msra.mxu0 0
  %861 = vmatprep.subr.bf16.mxu0 0
  %862 = vmatpush1.bf16.msra.mxu0 0
  %863 = vmatprep.subr.bf16.mxu0 0
  %864 = vmatpush1.bf16.msra.mxu0 0
  %865 = vmatprep.subr.bf16.mxu0 0
  %866 = vmatpush1.bf16.msra.mxu0 0
  %867 = vmatprep.subr.bf16.mxu0 0
  %868 = vmatpush1.bf16.msra.mxu0 0
  %869 = vmatprep.subr.bf16.mxu0 0
  %870 = vmatpush1.bf16.msra.mxu0 0
  %871 = vmatprep.subr.bf16.mxu0 0
  %872 = vmatpush1.bf16.msra.mxu0 0
  %873 = vmatprep.subr.bf16.mxu0 0
  %874 = vmatpush1.bf16.msra.mxu0 0
  %875 = vmatprep.subr.bf16.mxu0 0
  %876 = vmatpush1.bf16.msra.mxu0 0
  %877 = vmatprep.subr.bf16.mxu0 0
  %878 = vmatpush1.bf16.msra.mxu0 0
  %879 = vmatprep.subr.bf16.mxu0 0
  %880 = vmatpush1.bf16.msra.mxu0 0
  %881 = vmatprep.subr.bf16.mxu0 0
  %882 = vmatpush1.bf16.msra.mxu0 0
  %883 = vmatprep.subr.bf16.mxu0 0
  %884 = vmatpush1.bf16.msra.mxu0 0
  %885 = vmatprep.subr.bf16.mxu0 0
  %886 = vmatpush1.bf16.msra.mxu0 0
  %887 = vmatprep.mubr.bf16.mxu0 0
  %888 = vmatmul.mubr.bf16.gmra.mrb[0].mxu0 %v853
  %v889 = vpop.f32.mrb[0].mxu0
  %v890 = vadd.f32 %v279, %v889
  %v891 = vpop.f32.mrb[0].mxu0
  %v892 = vpop.f32.mrb[0].mxu0
  %v893 = vadd.f32 %v282, %v892
  %v894 = vpop.f32.mrb[0].mxu0
  %895 = vdwg.mxu0
  %v896 = vmax.f32 %v890, 0.0
  %v897 = vmax.f32 %v893, 0.0
  %v898 = vpack.c.bf16 %v897, %v896
  %899 = vmatprep.subr.bf16.mxu0 0
  %900 = vmatpush1.bf16.msra.mxu0 %v593
  %901 = vmatprep.subr.bf16.mxu0 0
  %902 = vmatpush1.bf16.msra.mxu0 %v594
  %903 = vmatprep.subr.bf16.mxu0 0
  %904 = vmatpush1.bf16.msra.mxu0 %v595
  %905 = vmatprep.subr.bf16.mxu0 0
  %906 = vmatpush1.bf16.msra.mxu0 %v596
  %907 = vmatprep.subr.bf16.mxu0 0
  %908 = vmatpush1.bf16.msra.mxu0 %v597
  %909 = vmatprep.subr.bf16.mxu0 0
  %910 = vmatpush1.bf16.msra.mxu0 %v598
  %911 = vmatprep.subr.bf16.mxu0 0
  %912 = vmatpush1.bf16.msra.mxu0 %v599
  %913 = vmatprep.subr.bf16.mxu0 0
  %914 = vmatpush1.bf16.msra.mxu0 %v600
  %915 = vmatprep.subr.bf16.mxu0 0
  %916 = vmatpush1.bf16.msra.mxu0 0
  %917 = vmatprep.subr.bf16.mxu0 0
  %918 = vmatpush1.bf16.msra.mxu0 0
  %919 = vmatprep.subr.bf16.mxu0 0
  %920 = vmatpush1.bf16.msra.mxu0 0
  %921 = vmatprep.subr.bf16.mxu0 0
  %922 = vmatpush1.bf16.msra.mxu0 0
  %923 = vmatprep.subr.bf16.mxu0 0
  %924 = vmatpush1.bf16.msra.mxu0 0
  %925 = vmatprep.subr.bf16.mxu0 0
  %926 = vmatpush1.bf16.msra.mxu0 0
  %927 = vmatprep.subr.bf16.mxu0 0
  %928 = vmatpush1.bf16.msra.mxu0 0
  %929 = vmatprep.subr.bf16.mxu0 0
  %930 = vmatpush1.bf16.msra.mxu0 0
  %931 = vmatprep.mubr.bf16.mxu0 0
  %932 = vmatmul.mubr.bf16.gmra.mrb[0].mxu0 %v898
  %v933 = vpop.f32.mrb[0].mxu0
  %v934 = vadd.f32 0.0, %v933
  %v935 = vpop.f32.mrb[0].mxu0
  %v936 = vpop.f32.mrb[0].mxu0
  %v937 = vadd.f32 0.0, %v936
  %v938 = vpop.f32.mrb[0].mxu0
  %939 = vdwg.mxu0
  %s940 = scalar_lea.vmem %s4, 24
  %v941 = vld [vmem:[%s940] sm:$0xf]
  %v942 = vld [vmem:[%s940 + $0x4] sm:$0xf]
  %v943 = vpack.c.bf16 %v937, %v934
  %v946 = vunpack.c.l.b16 %v941
  %v947 = vunpack.c.l.b16 %v942
  %v948 = vpack.c.b16 %v947, %v946
  %v950 = vsel %vm136, %v948, 0
  %952 = vmatprep.subr.bf16.mxu0 0
  %953 = vmatpush1.bf16.msra.mxu0 %v943
  %954 = vmatprep.subr.bf16.mxu0 0
  %955 = vmatpush1.bf16.msra.mxu0 0
  %956 = vmatprep.subr.bf16.mxu0 0
  %957 = vmatpush1.bf16.msra.mxu0 0
  %958 = vmatprep.subr.bf16.mxu0 0
  %959 = vmatpush1.bf16.msra.mxu0 0
  %960 = vmatprep.subr.bf16.mxu0 0
  %961 = vmatpush1.bf16.msra.mxu0 0
  %962 = vmatprep.subr.bf16.mxu0 0
  %963 = vmatpush1.bf16.msra.mxu0 0
  %964 = vmatprep.subr.bf16.mxu0 0
  %965 = vmatpush1.bf16.msra.mxu0 0
  %966 = vmatprep.subr.bf16.mxu0 0
  %967 = vmatpush1.bf16.msra.mxu0 0
  %968 = vmatprep.subr.bf16.mxu0 0
  %969 = vmatpush1.bf16.msra.mxu0 0
  %970 = vmatprep.subr.bf16.mxu0 0
  %971 = vmatpush1.bf16.msra.mxu0 0
  %972 = vmatprep.subr.bf16.mxu0 0
  %973 = vmatpush1.bf16.msra.mxu0 0
  %974 = vmatprep.subr.bf16.mxu0 0
  %975 = vmatpush1.bf16.msra.mxu0 0
  %976 = vmatprep.subr.bf16.mxu0 0
  %977 = vmatpush1.bf16.msra.mxu0 0
  %978 = vmatprep.subr.bf16.mxu0 0
  %979 = vmatpush1.bf16.msra.mxu0 0
  %980 = vmatprep.subr.bf16.mxu0 0
  %981 = vmatpush1.bf16.msra.mxu0 0
  %982 = vmatprep.subr.bf16.mxu0 0
  %983 = vmatpush1.bf16.msra.mxu0 0
  %984 = vmatprep.mubr.bf16.mxu0 0
  %985 = vmatmul.mubr.bf16.gmra.mrb[0].mxu0 %v950
  %v986 = vpop.f32.mrb[0].mxu0
  %v987 = vadd.f32 %v331, %v986
  %v988 = vpop.f32.mrb[0].mxu0
  %v989 = vpop.f32.mrb[0].mxu0
  %v990 = vadd.f32 %v334, %v989
  %v991 = vpop.f32.mrb[0].mxu0
  %992 = vdwg.mxu0
  %v993 = vmax.f32 %v987, 0.0
  %v994 = vmax.f32 %v990, 0.0
  %v995 = vpack.c.bf16 %v994, %v993
  %996 = vmatprep.subr.bf16.mxu0 0
  %997 = vmatpush1.bf16.msra.mxu0 %v593
  %998 = vmatprep.subr.bf16.mxu0 0
  %999 = vmatpush1.bf16.msra.mxu0 %v594
  %1000 = vmatprep.subr.bf16.mxu0 0
  %1001 = vmatpush1.bf16.msra.mxu0 %v595
  %1002 = vmatprep.subr.bf16.mxu0 0
  %1003 = vmatpush1.bf16.msra.mxu0 %v596
  %1004 = vmatprep.subr.bf16.mxu0 0
  %1005 = vmatpush1.bf16.msra.mxu0 %v597
  %1006 = vmatprep.subr.bf16.mxu0 0
  %1007 = vmatpush1.bf16.msra.mxu0 %v598
  %1008 = vmatprep.subr.bf16.mxu0 0
  %1009 = vmatpush1.bf16.msra.mxu0 %v599
  %1010 = vmatprep.subr.bf16.mxu0 0
  %1011 = vmatpush1.bf16.msra.mxu0 %v600
  %1012 = vmatprep.subr.bf16.mxu0 0
  %1013 = vmatpush1.bf16.msra.mxu0 0
  %1014 = vmatprep.subr.bf16.mxu0 0
  %1015 = vmatpush1.bf16.msra.mxu0 0
  %1016 = vmatprep.subr.bf16.mxu0 0
  %1017 = vmatpush1.bf16.msra.mxu0 0
  %1018 = vmatprep.subr.bf16.mxu0 0
  %1019 = vmatpush1.bf16.msra.mxu0 0
  %1020 = vmatprep.subr.bf16.mxu0 0
  %1021 = vmatpush1.bf16.msra.mxu0 0
  %1022 = vmatprep.subr.bf16.mxu0 0
  %1023 = vmatpush1.bf16.msra.mxu0 0
  %1024 = vmatprep.subr.bf16.mxu0 0
  %1025 = vmatpush1.bf16.msra.mxu0 0
  %1026 = vmatprep.subr.bf16.mxu0 0
  %1027 = vmatpush1.bf16.msra.mxu0 0
  %1028 = vmatprep.mubr.bf16.mxu0 0
  %1029 = vmatmul.mubr.bf16.gmra.mrb[0].mxu0 %v995
  %v1030 = vpop.f32.mrb[0].mxu0
  %v1031 = vadd.f32 0.0, %v1030
  %v1032 = vpop.f32.mrb[0].mxu0
  %v1033 = vpop.f32.mrb[0].mxu0
  %v1034 = vadd.f32 0.0, %v1033
  %v1035 = vpop.f32.mrb[0].mxu0
  %1036 = vdwg.mxu0
  %s1037 = scalar_lea.vmem %s4, 32
  %v1038 = vld [vmem:[%s1037] sm:$0xf]
  %v1039 = vld [vmem:[%s1037 + $0x4] sm:$0xf]
  %v1040 = vpack.c.bf16 %v1034, %v1031
  %v1043 = vunpack.c.l.b16 %v1038
  %v1044 = vunpack.c.l.b16 %v1039
  %v1045 = vpack.c.b16 %v1044, %v1043
  %v1047 = vsel %vm136, %v1045, 0
  %1049 = vmatprep.subr.bf16.mxu0 0
  %1050 = vmatpush1.bf16.msra.mxu0 %v1040
  %1051 = vmatprep.subr.bf16.mxu0 0
  %1052 = vmatpush1.bf16.msra.mxu0 0
  %1053 = vmatprep.subr.bf16.mxu0 0
  %1054 = vmatpush1.bf16.msra.mxu0 0
  %1055 = vmatprep.subr.bf16.mxu0 0
  %1056 = vmatpush1.bf16.msra.mxu0 0
  %1057 = vmatprep.subr.bf16.mxu0 0
  %1058 = vmatpush1.bf16.msra.mxu0 0
  %1059 = vmatprep.subr.bf16.mxu0 0
  %1060 = vmatpush1.bf16.msra.mxu0 0
  %1061 = vmatprep.subr.bf16.mxu0 0
  %1062 = vmatpush1.bf16.msra.mxu0 0
  %1063 = vmatprep.subr.bf16.mxu0 0
  %1064 = vmatpush1.bf16.msra.mxu0 0
  %1065 = vmatprep.subr.bf16.mxu0 0
  %1066 = vmatpush1.bf16.msra.mxu0 0
  %1067 = vmatprep.subr.bf16.mxu0 0
  %1068 = vmatpush1.bf16.msra.mxu0 0
  %1069 = vmatprep.subr.bf16.mxu0 0
  %1070 = vmatpush1.bf16.msra.mxu0 0
  %1071 = vmatprep.subr.bf16.mxu0 0
  %1072 = vmatpush1.bf16.msra.mxu0 0
  %1073 = vmatprep.subr.bf16.mxu0 0
  %1074 = vmatpush1.bf16.msra.mxu0 0
  %1075 = vmatprep.subr.bf16.mxu0 0
  %1076 = vmatpush1.bf16.msra.mxu0 0
  %1077 = vmatprep.subr.bf16.mxu0 0
  %1078 = vmatpush1.bf16.msra.mxu0 0
  %1079 = vmatprep.subr.bf16.mxu0 0
  %1080 = vmatpush1.bf16.msra.mxu0 0
  %1081 = vmatprep.mubr.bf16.mxu0 0
  %1082 = vmatmul.mubr.bf16.gmra.mrb[0].mxu0 %v1047
  %v1083 = vpop.f32.mrb[0].mxu0
  %v1084 = vadd.f32 %v383, %v1083
  %v1085 = vpop.f32.mrb[0].mxu0
  %v1086 = vpop.f32.mrb[0].mxu0
  %v1087 = vadd.f32 %v386, %v1086
  %v1088 = vpop.f32.mrb[0].mxu0
  %1089 = vdwg.mxu0
  %v1090 = vmax.f32 %v1084, 0.0
  %v1091 = vmax.f32 %v1087, 0.0
  %v1092 = vpack.c.bf16 %v1091, %v1090
  %1093 = vmatprep.subr.bf16.mxu0 0
  %1094 = vmatpush1.bf16.msra.mxu0 %v593
  %1095 = vmatprep.subr.bf16.mxu0 0
  %1096 = vmatpush1.bf16.msra.mxu0 %v594
  %1097 = vmatprep.subr.bf16.mxu0 0
  %1098 = vmatpush1.bf16.msra.mxu0 %v595
  %1099 = vmatprep.subr.bf16.mxu0 0
  %1100 = vmatpush1.bf16.msra.mxu0 %v596
  %1101 = vmatprep.subr.bf16.mxu0 0
  %1102 = vmatpush1.bf16.msra.mxu0 %v597
  %1103 = vmatprep.subr.bf16.mxu0 0
  %1104 = vmatpush1.bf16.msra.mxu0 %v598
  %1105 = vmatprep.subr.bf16.mxu0 0
  %1106 = vmatpush1.bf16.msra.mxu0 %v599
  %1107 = vmatprep.subr.bf16.mxu0 0
  %1108 = vmatpush1.bf16.msra.mxu0 %v600
  %1109 = vmatprep.subr.bf16.mxu0 0
  %1110 = vmatpush1.bf16.msra.mxu0 0
  %1111 = vmatprep.subr.bf16.mxu0 0
  %1112 = vmatpush1.bf16.msra.mxu0 0
  %1113 = vmatprep.subr.bf16.mxu0 0
  %1114 = vmatpush1.bf16.msra.mxu0 0
  %1115 = vmatprep.subr.bf16.mxu0 0
  %1116 = vmatpush1.bf16.msra.mxu0 0
  %1117 = vmatprep.subr.bf16.mxu0 0
  %1118 = vmatpush1.bf16.msra.mxu0 0
  %1119 = vmatprep.subr.bf16.mxu0 0
  %1120 = vmatpush1.bf16.msra.mxu0 0
  %1121 = vmatprep.subr.bf16.mxu0 0
  %1122 = vmatpush1.bf16.msra.mxu0 0
  %1123 = vmatprep.subr.bf16.mxu0 0
  %1124 = vmatpush1.bf16.msra.mxu0 0
  %1125 = vmatprep.mubr.bf16.mxu0 0
  %1126 = vmatmul.mubr.bf16.gmra.mrb[0].mxu0 %v1092
  %v1127 = vpop.f32.mrb[0].mxu0
  %v1128 = vadd.f32 0.0, %v1127
  %v1129 = vpop.f32.mrb[0].mxu0
  %v1130 = vpop.f32.mrb[0].mxu0
  %v1131 = vadd.f32 0.0, %v1130
  %v1132 = vpop.f32.mrb[0].mxu0
  %1133 = vdwg.mxu0
  %s1134 = scalar_lea.vmem %s4, 40
  %v1135 = vld [vmem:[%s1134] sm:$0xf]
  %v1136 = vld [vmem:[%s1134 + $0x4] sm:$0xf]
  %v1137 = vpack.c.bf16 %v1131, %v1128
  %v1140 = vunpack.c.l.b16 %v1135
  %v1141 = vunpack.c.l.b16 %v1136
  %v1142 = vpack.c.b16 %v1141, %v1140
  %v1144 = vsel %vm136, %v1142, 0
  %1146 = vmatprep.subr.bf16.mxu0 0
  %1147 = vmatpush1.bf16.msra.mxu0 %v1137
  %1148 = vmatprep.subr.bf16.mxu0 0
  %1149 = vmatpush1.bf16.msra.mxu0 0
  %1150 = vmatprep.subr.bf16.mxu0 0
  %1151 = vmatpush1.bf16.msra.mxu0 0
  %1152 = vmatprep.subr.bf16.mxu0 0
  %1153 = vmatpush1.bf16.msra.mxu0 0
  %1154 = vmatprep.subr.bf16.mxu0 0
  %1155 = vmatpush1.bf16.msra.mxu0 0
  %1156 = vmatprep.subr.bf16.mxu0 0
  %1157 = vmatpush1.bf16.msra.mxu0 0
  %1158 = vmatprep.subr.bf16.mxu0 0
  %1159 = vmatpush1.bf16.msra.mxu0 0
  %1160 = vmatprep.subr.bf16.mxu0 0
  %1161 = vmatpush1.bf16.msra.mxu0 0
  %1162 = vmatprep.subr.bf16.mxu0 0
  %1163 = vmatpush1.bf16.msra.mxu0 0
  %1164 = vmatprep.subr.bf16.mxu0 0
  %1165 = vmatpush1.bf16.msra.mxu0 0
  %1166 = vmatprep.subr.bf16.mxu0 0
  %1167 = vmatpush1.bf16.msra.mxu0 0
  %1168 = vmatprep.subr.bf16.mxu0 0
  %1169 = vmatpush1.bf16.msra.mxu0 0
  %1170 = vmatprep.subr.bf16.mxu0 0
  %1171 = vmatpush1.bf16.msra.mxu0 0
  %1172 = vmatprep.subr.bf16.mxu0 0
  %1173 = vmatpush1.bf16.msra.mxu0 0
  %1174 = vmatprep.subr.bf16.mxu0 0
  %1175 = vmatpush1.bf16.msra.mxu0 0
  %1176 = vmatprep.subr.bf16.mxu0 0
  %1177 = vmatpush1.bf16.msra.mxu0 0
  %1178 = vmatprep.mubr.bf16.mxu0 0
  %1179 = vmatmul.mubr.bf16.gmra.mrb[0].mxu0 %v1144
  %v1180 = vpop.f32.mrb[0].mxu0
  %v1181 = vadd.f32 %v435, %v1180
  %v1182 = vpop.f32.mrb[0].mxu0
  %v1183 = vpop.f32.mrb[0].mxu0
  %v1184 = vadd.f32 %v438, %v1183
  %v1185 = vpop.f32.mrb[0].mxu0
  %1186 = vdwg.mxu0
  %v1187 = vmax.f32 %v1181, 0.0
  %v1188 = vmax.f32 %v1184, 0.0
  %v1189 = vpack.c.bf16 %v1188, %v1187
  %1190 = vmatprep.subr.bf16.mxu0 0
  %1191 = vmatpush1.bf16.msra.mxu0 %v593
  %1192 = vmatprep.subr.bf16.mxu0 0
  %1193 = vmatpush1.bf16.msra.mxu0 %v594
  %1194 = vmatprep.subr.bf16.mxu0 0
  %1195 = vmatpush1.bf16.msra.mxu0 %v595
  %1196 = vmatprep.subr.bf16.mxu0 0
  %1197 = vmatpush1.bf16.msra.mxu0 %v596
  %1198 = vmatprep.subr.bf16.mxu0 0
  %1199 = vmatpush1.bf16.msra.mxu0 %v597
  %1200 = vmatprep.subr.bf16.mxu0 0
  %1201 = vmatpush1.bf16.msra.mxu0 %v598
  %1202 = vmatprep.subr.bf16.mxu0 0
  %1203 = vmatpush1.bf16.msra.mxu0 %v599
  %1204 = vmatprep.subr.bf16.mxu0 0
  %1205 = vmatpush1.bf16.msra.mxu0 %v600
  %1206 = vmatprep.subr.bf16.mxu0 0
  %1207 = vmatpush1.bf16.msra.mxu0 0
  %1208 = vmatprep.subr.bf16.mxu0 0
  %1209 = vmatpush1.bf16.msra.mxu0 0
  %1210 = vmatprep.subr.bf16.mxu0 0
  %1211 = vmatpush1.bf16.msra.mxu0 0
  %1212 = vmatprep.subr.bf16.mxu0 0
  %1213 = vmatpush1.bf16.msra.mxu0 0
  %1214 = vmatprep.subr.bf16.mxu0 0
  %1215 = vmatpush1.bf16.msra.mxu0 0
  %1216 = vmatprep.subr.bf16.mxu0 0
  %1217 = vmatpush1.bf16.msra.mxu0 0
  %1218 = vmatprep.subr.bf16.mxu0 0
  %1219 = vmatpush1.bf16.msra.mxu0 0
  %1220 = vmatprep.subr.bf16.mxu0 0
  %1221 = vmatpush1.bf16.msra.mxu0 0
  %1222 = vmatprep.mubr.bf16.mxu0 0
  %1223 = vmatmul.mubr.bf16.gmra.mrb[0].mxu0 %v1189
  %v1224 = vpop.f32.mrb[0].mxu0
  %v1225 = vadd.f32 0.0, %v1224
  %v1226 = vpop.f32.mrb[0].mxu0
  %v1227 = vpop.f32.mrb[0].mxu0
  %v1228 = vadd.f32 0.0, %v1227
  %v1229 = vpop.f32.mrb[0].mxu0
  %1230 = vdwg.mxu0
  %s1231 = scalar_lea.vmem %s4, 48
  %v1232 = vld [vmem:[%s1231] sm:$0xf]
  %v1233 = vld [vmem:[%s1231 + $0x4] sm:$0xf]
  %v1234 = vpack.c.bf16 %v1228, %v1225
  %v1237 = vunpack.c.l.b16 %v1232
  %v1238 = vunpack.c.l.b16 %v1233
  %v1239 = vpack.c.b16 %v1238, %v1237
  %v1241 = vsel %vm136, %v1239, 0
  %1243 = vmatprep.subr.bf16.mxu0 0
  %1244 = vmatpush1.bf16.msra.mxu0 %v1234
  %1245 = vmatprep.subr.bf16.mxu0 0
  %1246 = vmatpush1.bf16.msra.mxu0 0
  %1247 = vmatprep.subr.bf16.mxu0 0
  %1248 = vmatpush1.bf16.msra.mxu0 0
  %1249 = vmatprep.subr.bf16.mxu0 0
  %1250 = vmatpush1.bf16.msra.mxu0 0
  %1251 = vmatprep.subr.bf16.mxu0 0
  %1252 = vmatpush1.bf16.msra.mxu0 0
  %1253 = vmatprep.subr.bf16.mxu0 0
  %1254 = vmatpush1.bf16.msra.mxu0 0
  %1255 = vmatprep.subr.bf16.mxu0 0
  %1256 = vmatpush1.bf16.msra.mxu0 0
  %1257 = vmatprep.subr.bf16.mxu0 0
  %1258 = vmatpush1.bf16.msra.mxu0 0
  %1259 = vmatprep.subr.bf16.mxu0 0
  %1260 = vmatpush1.bf16.msra.mxu0 0
  %1261 = vmatprep.subr.bf16.mxu0 0
  %1262 = vmatpush1.bf16.msra.mxu0 0
  %1263 = vmatprep.subr.bf16.mxu0 0
  %1264 = vmatpush1.bf16.msra.mxu0 0
  %1265 = vmatprep.subr.bf16.mxu0 0
  %1266 = vmatpush1.bf16.msra.mxu0 0
  %1267 = vmatprep.subr.bf16.mxu0 0
  %1268 = vmatpush1.bf16.msra.mxu0 0
  %1269 = vmatprep.subr.bf16.mxu0 0
  %1270 = vmatpush1.bf16.msra.mxu0 0
  %1271 = vmatprep.subr.bf16.mxu0 0
  %1272 = vmatpush1.bf16.msra.mxu0 0
  %1273 = vmatprep.subr.bf16.mxu0 0
  %1274 = vmatpush1.bf16.msra.mxu0 0
  %1275 = vmatprep.mubr.bf16.mxu0 0
  %1276 = vmatmul.mubr.bf16.gmra.mrb[0].mxu0 %v1241
  %v1277 = vpop.f32.mrb[0].mxu0
  %v1278 = vadd.f32 %v487, %v1277
  %v1279 = vpop.f32.mrb[0].mxu0
  %v1280 = vpop.f32.mrb[0].mxu0
  %v1281 = vadd.f32 %v490, %v1280
  %v1282 = vpop.f32.mrb[0].mxu0
  %1283 = vdwg.mxu0
  %v1284 = vmax.f32 %v1278, 0.0
  %v1285 = vmax.f32 %v1281, 0.0
  %v1286 = vpack.c.bf16 %v1285, %v1284
  %1287 = vmatprep.subr.bf16.mxu0 0
  %1288 = vmatpush1.bf16.msra.mxu0 %v593
  %1289 = vmatprep.subr.bf16.mxu0 0
  %1290 = vmatpush1.bf16.msra.mxu0 %v594
  %1291 = vmatprep.subr.bf16.mxu0 0
  %1292 = vmatpush1.bf16.msra.mxu0 %v595
  %1293 = vmatprep.subr.bf16.mxu0 0
  %1294 = vmatpush1.bf16.msra.mxu0 %v596
  %1295 = vmatprep.subr.bf16.mxu0 0
  %1296 = vmatpush1.bf16.msra.mxu0 %v597
  %1297 = vmatprep.subr.bf16.mxu0 0
  %1298 = vmatpush1.bf16.msra.mxu0 %v598
  %1299 = vmatprep.subr.bf16.mxu0 0
  %1300 = vmatpush1.bf16.msra.mxu0 %v599
  %1301 = vmatprep.subr.bf16.mxu0 0
  %1302 = vmatpush1.bf16.msra.mxu0 %v600
  %1303 = vmatprep.subr.bf16.mxu0 0
  %1304 = vmatpush1.bf16.msra.mxu0 0
  %1305 = vmatprep.subr.bf16.mxu0 0
  %1306 = vmatpush1.bf16.msra.mxu0 0
  %1307 = vmatprep.subr.bf16.mxu0 0
  %1308 = vmatpush1.bf16.msra.mxu0 0
  %1309 = vmatprep.subr.bf16.mxu0 0
  %1310 = vmatpush1.bf16.msra.mxu0 0
  %1311 = vmatprep.subr.bf16.mxu0 0
  %1312 = vmatpush1.bf16.msra.mxu0 0
  %1313 = vmatprep.subr.bf16.mxu0 0
  %1314 = vmatpush1.bf16.msra.mxu0 0
  %1315 = vmatprep.subr.bf16.mxu0 0
  %1316 = vmatpush1.bf16.msra.mxu0 0
  %1317 = vmatprep.subr.bf16.mxu0 0
  %1318 = vmatpush1.bf16.msra.mxu0 0
  %1319 = vmatprep.mubr.bf16.mxu0 0
  %1320 = vmatmul.mubr.bf16.gmra.mrb[0].mxu0 %v1286
  %v1321 = vpop.f32.mrb[0].mxu0
  %v1322 = vadd.f32 0.0, %v1321
  %v1323 = vpop.f32.mrb[0].mxu0
  %v1324 = vpop.f32.mrb[0].mxu0
  %v1325 = vadd.f32 0.0, %v1324
  %v1326 = vpop.f32.mrb[0].mxu0
  %1327 = vdwg.mxu0
  %s1328 = scalar_lea.vmem %s4, 56
  %v1329 = vld [vmem:[%s1328] sm:$0xf]
  %v1330 = vld [vmem:[%s1328 + $0x4] sm:$0xf]
  %v1331 = vpack.c.bf16 %v1325, %v1322
  %v1334 = vunpack.c.l.b16 %v1329
  %v1335 = vunpack.c.l.b16 %v1330
  %v1336 = vpack.c.b16 %v1335, %v1334
  %v1338 = vsel %vm136, %v1336, 0
  %1340 = vmatprep.subr.bf16.mxu0 0
  %1341 = vmatpush1.bf16.msra.mxu0 %v1331
  %1342 = vmatprep.subr.bf16.mxu0 0
  %1343 = vmatpush1.bf16.msra.mxu0 0
  %1344 = vmatprep.subr.bf16.mxu0 0
  %1345 = vmatpush1.bf16.msra.mxu0 0
  %1346 = vmatprep.subr.bf16.mxu0 0
  %1347 = vmatpush1.bf16.msra.mxu0 0
  %1348 = vmatprep.subr.bf16.mxu0 0
  %1349 = vmatpush1.bf16.msra.mxu0 0
  %1350 = vmatprep.subr.bf16.mxu0 0
  %1351 = vmatpush1.bf16.msra.mxu0 0
  %1352 = vmatprep.subr.bf16.mxu0 0
  %1353 = vmatpush1.bf16.msra.mxu0 0
  %1354 = vmatprep.subr.bf16.mxu0 0
  %1355 = vmatpush1.bf16.msra.mxu0 0
  %1356 = vmatprep.subr.bf16.mxu0 0
  %1357 = vmatpush1.bf16.msra.mxu0 0
  %1358 = vmatprep.subr.bf16.mxu0 0
  %1359 = vmatpush1.bf16.msra.mxu0 0
  %1360 = vmatprep.subr.bf16.mxu0 0
  %1361 = vmatpush1.bf16.msra.mxu0 0
  %1362 = vmatprep.subr.bf16.mxu0 0
  %1363 = vmatpush1.bf16.msra.mxu0 0
  %1364 = vmatprep.subr.bf16.mxu0 0
  %1365 = vmatpush1.bf16.msra.mxu0 0
  %1366 = vmatprep.subr.bf16.mxu0 0
  %1367 = vmatpush1.bf16.msra.mxu0 0
  %1368 = vmatprep.subr.bf16.mxu0 0
  %1369 = vmatpush1.bf16.msra.mxu0 0
  %1370 = vmatprep.subr.bf16.mxu0 0
  %1371 = vmatpush1.bf16.msra.mxu0 0
  %1372 = vmatprep.mubr.bf16.mxu0 0
  %1373 = vmatmul.mubr.bf16.gmra.mrb[0].mxu0 %v1338
  %v1374 = vpop.f32.mrb[0].mxu0
  %v1375 = vadd.f32 %v539, %v1374
  %v1376 = vpop.f32.mrb[0].mxu0
  %v1377 = vpop.f32.mrb[0].mxu0
  %v1378 = vadd.f32 %v542, %v1377
  %v1379 = vpop.f32.mrb[0].mxu0
  %1380 = vdwg.mxu0
  %v1381 = vmax.f32 %v1375, 0.0
  %v1382 = vmax.f32 %v1378, 0.0
  %v1383 = vld [vmem:[%s6] sm:$0x1]
  %v1384 = vpack.c.bf16 %v1382, %v1381
  %v1385 = vld [vmem:[%s7] sm:$0x3]
  %1387 = vset.pattern.permute.xlu0 0
  %1388 = vperm.xlu0 %1387, %v1385
  %v1389 = vpop.permute.xlu0 %1388
  %v1392 = vsel %vm136, %v1383, 0
  %1394 = vmatprep.subr.bf16.mxu0 0
  %1395 = vmatpush1.bf16.msra.mxu0 %v1384
  %1396 = vmatprep.subr.bf16.mxu0 0
  %1397 = vmatpush1.bf16.msra.mxu0 0
  %1398 = vmatprep.subr.bf16.mxu0 0
  %1399 = vmatpush1.bf16.msra.mxu0 0
  %1400 = vmatprep.subr.bf16.mxu0 0
  %1401 = vmatpush1.bf16.msra.mxu0 0
  %1402 = vmatprep.subr.bf16.mxu0 0
  %1403 = vmatpush1.bf16.msra.mxu0 0
  %1404 = vmatprep.subr.bf16.mxu0 0
  %1405 = vmatpush1.bf16.msra.mxu0 0
  %1406 = vmatprep.subr.bf16.mxu0 0
  %1407 = vmatpush1.bf16.msra.mxu0 0
  %1408 = vmatprep.subr.bf16.mxu0 0
  %1409 = vmatpush1.bf16.msra.mxu0 0
  %1410 = vmatprep.subr.bf16.mxu0 0
  %1411 = vmatpush1.bf16.msra.mxu0 0
  %1412 = vmatprep.subr.bf16.mxu0 0
  %1413 = vmatpush1.bf16.msra.mxu0 0
  %1414 = vmatprep.subr.bf16.mxu0 0
  %1415 = vmatpush1.bf16.msra.mxu0 0
  %1416 = vmatprep.subr.bf16.mxu0 0
  %1417 = vmatpush1.bf16.msra.mxu0 0
  %1418 = vmatprep.subr.bf16.mxu0 0
  %1419 = vmatpush1.bf16.msra.mxu0 0
  %1420 = vmatprep.subr.bf16.mxu0 0
  %1421 = vmatpush1.bf16.msra.mxu0 0
  %1422 = vmatprep.subr.bf16.mxu0 0
  %1423 = vmatpush1.bf16.msra.mxu0 0
  %1424 = vmatprep.subr.bf16.mxu0 0
  %1425 = vmatpush1.bf16.msra.mxu0 0
  %1426 = vmatprep.mubr.bf16.mxu0 0
  %1427 = vmatmul.mubr.bf16.gmra.mrb[0].mxu0 %v1392
  %v1428 = vpop.f32.mrb[0].mxu0
  %v1429 = vadd.f32 %v1389, %v1428
  %v1430 = vpop.f32.mrb[0].mxu0
  %v1431 = vpop.f32.mrb[0].mxu0
  %v1432 = vpop.f32.mrb[0].mxu0
  %1433 = vdwg.mxu0
  %1434 = vst [vmem:[%s8] sm:$0x3] %v1429
  // Predicated region
  $region34: #{net_forward.1} parent=0 // pred_check
    _
  $region35: #{net_forward.1} parent=0 // pred_check_branch
    %1436 = sbr.rel (0) target = $region37
  $region36: #{net_forward.1} parent=0 // pred_region
    _
  $region37: #{net_forward.1} parent=0 // pred_fallthru
    _
  // Predicated region
  $region38: #{net_forward.1} parent=0 // pred_check
    _
  $region39: #{net_forward.1} parent=0 // pred_check_branch
    %1438 = sbr.rel (0) target = $region41
  $region40: #{net_forward.1} parent=0 // pred_region
    _
  $region41: #{net_forward.1} parent=0 // pred_fallthru
    _

</llo_original>
